<compile_context>
chip_gen: v5e
topology: v5e:2x2
jax: 0.10.0
libtpu: 0.0.40
codegen_flags: <defaults>
</compile_context>

<pallas_src>
import functools
import math

import jax
import jax.numpy as jnp
from jax.experimental import pallas as pl
from jax.experimental.pallas import tpu as pltpu

LAYER_DIMS = [784, 512, 256, 128, 64, 32, 10]
IN_FEATURES = 784
PADDED_OUT = 128          # 10 -> 128 lanes: unmasked, lane-dense vst
NEG_BIG = -1e30           # padded-logit bias; requires b6 kept in f32
_KERNEL_DIMS = [IN_FEATURES, 512, 256, 128, 64, 32, PADDED_OUT]


def _round_up(n, m):
    return ((n + m - 1) // m) * m


def _mlp_kernel(x_ref,
                w1, b1, w2, b2, w3, b3, w4, b4, w5, b5, w6, b6,
                out_ref):
    """Fused 6-layer MLP + log_softmax on one batch tile.

    bf16 operands into the MXU; accumulation and all element-wise math
    (bias add, ReLU, log_softmax) stay in f32 (portable to v5e: no bf16 VPU).
    """
    h = x_ref[...]                                   # bf16 [tile, 784]

    def dense_relu(h_bf16, w_ref, b_ref):
        y = jnp.dot(h_bf16, w_ref[...], preferred_element_type=jnp.float32)
        y = jnp.maximum(y + b_ref[...], 0.0)         # f32 element-wise
        return y.astype(jnp.bfloat16)                # bf16 operand for next MXU pass

    h = dense_relu(h, w1, b1)
    h = dense_relu(h, w2, b2)
    h = dense_relu(h, w3, b3)
    h = dense_relu(h, w4, b4)
    h = dense_relu(h, w5, b5)

    # Last layer: padded lanes (10..127) have zero weight columns and bias
    # NEG_BIG, so they never win the max and contribute ~0 to the denominator.
    logits = jnp.dot(h, w6[...], preferred_element_type=jnp.float32) + b6[...]

    m = jnp.max(logits, axis=-1, keepdims=True)
    shifted = logits - m
    lse = jnp.log(jnp.sum(jnp.exp(shifted), axis=-1, keepdims=True))
    out_ref[...] = shifted - lse                     # f32, 128-lane dense store


def _prepare_params(params):
    """One-time weight prep: weights -> bf16 [in, out]; w6 zero-padded to 128
    cols; biases -> f32 [1, out] with b6's padded lanes set to NEG_BIG.
    NOTE: b6 must stay f32 (NEG_BIG is not representable in bf16 as intended)."""
    flat = []
    for li in range(6):
        w, b = params[li]
        w = jnp.asarray(w, jnp.float32)
        b = jnp.asarray(b, jnp.float32).reshape(1, -1)
        if li == 5:
            w = jnp.pad(w, ((0, 0), (0, PADDED_OUT - LAYER_DIMS[6])))
            b = jnp.pad(b, ((0, 0), (0, PADDED_OUT - LAYER_DIMS[6])),
                        constant_values=NEG_BIG)
        flat.append(w.astype(jnp.bfloat16))
        flat.append(b)                               # biases stay f32
    return tuple(flat)


def _pick_batch_tile(B):
    """Throughput-oriented tile: big (512/1024, 128-aligned) at large B to
    amortize per-grid-step overhead and keep MXU runs long; small, 16-aligned
    (bf16 sublane packing) tile at tiny B to avoid padding waste. Even
    tile=1024 uses ~10 MiB VMEM -> well under every generation's budget."""
    if B >= 4096:
        return 1024
    if B >= 1024:
        return 512
    if B >= 128:
        return min(512, _round_up(B, 128))
    return max(16, _round_up(B, 16))


@functools.partial(jax.jit, static_argnames=("batch_tile",))
def _forward(x, flat_params, batch_tile):
    """End-to-end jitted forward: flatten, pad batch, cast to bf16, fused
    Pallas MLP, slice back to [B, 10]. Returns f32 log-probs."""
    x2d = jnp.reshape(x, (-1, IN_FEATURES)).astype(jnp.float32)
    B = x2d.shape[0]
    Bp = _round_up(B, batch_tile)
    x_pad = jnp.pad(x2d, ((0, Bp - B), (0, 0))).astype(jnp.bfloat16)

    # Weight/bias blocks equal their full array shape (constant index_map) ->
    # resident in VMEM across the batch grid; default buffering is fine.
    in_specs = [pl.BlockSpec((batch_tile, IN_FEATURES), lambda i: (i, 0))]
    for li in range(6):
        fin, fout = _KERNEL_DIMS[li], _KERNEL_DIMS[li + 1]
        in_specs.append(pl.BlockSpec((fin, fout), lambda i: (0, 0)))
        in_specs.append(pl.BlockSpec((1, fout), lambda i: (0, 0)))

    out = pl.pallas_call(
        _mlp_kernel,
        out_shape=jax.ShapeDtypeStruct((Bp, PADDED_OUT), jnp.float32),
        grid_spec=pltpu.PrefetchScalarGridSpec(
            num_scalar_prefetch=0,
            grid=(Bp // batch_tile,),
            in_specs=in_specs,
            out_specs=pl.BlockSpec((batch_tile, PADDED_OUT), lambda i: (i, 0)),
        ),
        compiler_params=pltpu.CompilerParams(
            dimension_semantics=("parallel",)),
    )(x_pad, *flat_params)

    return out[:B, :LAYER_DIMS[-1]]                  # fused slice (inside jit)


class PallasNet:
    """Holds the one-time prepared (padded/bf16-cast) parameters."""

    def __init__(self, params):
        self._flat = _prepare_params(params)

    def __call__(self, x, batch_tile=None):
        total = 1
        for d in jnp.shape(x):
            total *= d
        B = total // IN_FEATURES
        if batch_tile is None:
            batch_tile = _pick_batch_tile(B)
        batch_tile = max(16, _round_up(int(batch_tile), 16))
        return _forward(x, self._flat, batch_tile)


def init_params(key):
    """Deterministic init mimicking nn.Linear default U(-1/sqrt(fan_in), +).
    Weights stored [in_features, out_features]."""
    params = []
    for li in range(6):
        fin, fout = LAYER_DIMS[li], LAYER_DIMS[li + 1]
        key, kw, kb = jax.random.split(key, 3)
        bound = 1.0 / math.sqrt(fin)
        w = jax.random.uniform(kw, (fin, fout), jnp.float32, -bound, bound)
        b = jax.random.uniform(kb, (fout,), jnp.float32, -bound, bound)
        params.append((w, b))
    return params


def reference_forward(x, params):
    """Pure-JAX f32 reference (matches the PyTorch module semantics)."""
    h = jnp.reshape(x, (-1, LAYER_DIMS[0])).astype(jnp.float32)
    for li in range(5):
        w, b = params[li]
        h = jnp.maximum(h @ w + b, 0.0)
    w, b = params[5]
    logits = h @ w + b
    return jax.nn.log_softmax(logits, axis=1)


if __name__ == "__main__":
    key = jax.random.PRNGKey(0)
    kp, kx = jax.random.split(key)
    params = init_params(kp)
    net = PallasNet(params)

    # MNIST-like input: batch=8, NCHW [8, 1, 28, 28]
    x = jax.random.normal(kx, (8, 1, 28, 28), jnp.float32)

    out = jax.block_until_ready(net(x))
    assert out.shape == (8, 10)

    # Correctness vs f32 reference (bf16 matmul operands -> loose tolerance).
    ref = reference_forward(x, params)
    assert jnp.allclose(out, ref, atol=2e-2), "mismatch vs f32 reference"
    # log_softmax property over the 10 real classes (padded lanes excluded).
    assert jnp.allclose(jnp.sum(jnp.exp(out), axis=1), 1.0, atol=1e-3)

    # Exercise the batch-padding path (B not a multiple of the tile).
    x_odd = jax.random.normal(kx, (5, 1, 28, 28), jnp.float32)
    out_odd = jax.block_until_ready(net(x_odd))
    ref_odd = reference_forward(x_odd, params)
    assert out_odd.shape == (5, 10)
    assert jnp.allclose(out_odd, ref_odd, atol=2e-2), "mismatch on padded batch"

    print("KERNEL_OK")
</pallas_src>

<mosaic_0001>
module attributes {stable_mosaic.version = 11 : i64} {
  func.func @_mlp_kernel(%arg0: i32, %arg1: memref<16x784xbf16, #tpu.memory_space<vmem>>, %arg2: memref<784x512xbf16, #tpu.memory_space<vmem>>, %arg3: memref<1x512xf32, #tpu.memory_space<vmem>>, %arg4: memref<512x256xbf16, #tpu.memory_space<vmem>>, %arg5: memref<1x256xf32, #tpu.memory_space<vmem>>, %arg6: memref<256x128xbf16, #tpu.memory_space<vmem>>, %arg7: memref<1x128xf32, #tpu.memory_space<vmem>>, %arg8: memref<128x64xbf16, #tpu.memory_space<vmem>>, %arg9: memref<1x64xf32, #tpu.memory_space<vmem>>, %arg10: memref<64x32xbf16, #tpu.memory_space<vmem>>, %arg11: memref<1x32xf32, #tpu.memory_space<vmem>>, %arg12: memref<32x128xbf16, #tpu.memory_space<vmem>>, %arg13: memref<1x128xf32, #tpu.memory_space<vmem>>, %arg14: memref<16x128xf32, #tpu.memory_space<vmem>>) attributes {dimension_semantics = [#tpu.dimension_semantics<parallel>], iteration_bounds = array<i64: 1>, scalar_prefetch = 0 : i64, scratch_operands = 0 : i64, tpu.core_type = #tpu.core_type<tc>, window_params = [{transform_indices = @transform_0, window_bounds = array<i64: 16, 784>}, {pipeline_mode = #tpu.pipeline_mode<synchronous>, transform_indices = @transform_1, window_bounds = array<i64: 784, 512>}, {pipeline_mode = #tpu.pipeline_mode<synchronous>, transform_indices = @transform_2, window_bounds = array<i64: 1, 512>}, {pipeline_mode = #tpu.pipeline_mode<synchronous>, transform_indices = @transform_3, window_bounds = array<i64: 512, 256>}, {pipeline_mode = #tpu.pipeline_mode<synchronous>, transform_indices = @transform_4, window_bounds = array<i64: 1, 256>}, {pipeline_mode = #tpu.pipeline_mode<synchronous>, transform_indices = @transform_5, window_bounds = array<i64: 256, 128>}, {pipeline_mode = #tpu.pipeline_mode<synchronous>, transform_indices = @transform_6, window_bounds = array<i64: 1, 128>}, {pipeline_mode = #tpu.pipeline_mode<synchronous>, transform_indices = @transform_7, window_bounds = array<i64: 128, 64>}, {pipeline_mode = #tpu.pipeline_mode<synchronous>, transform_indices = @transform_8, window_bounds = array<i64: 1, 64>}, {pipeline_mode = #tpu.pipeline_mode<synchronous>, transform_indices = @transform_9, window_bounds = array<i64: 64, 32>}, {pipeline_mode = #tpu.pipeline_mode<synchronous>, transform_indices = @transform_10, window_bounds = array<i64: 1, 32>}, {pipeline_mode = #tpu.pipeline_mode<synchronous>, transform_indices = @transform_11, window_bounds = array<i64: 32, 128>}, {pipeline_mode = #tpu.pipeline_mode<synchronous>, transform_indices = @transform_12, window_bounds = array<i64: 1, 128>}, {transform_indices = @transform_13, window_bounds = array<i64: 16, 128>}]} {
    %c0 = arith.constant 0 : index
    %c0_0 = arith.constant 0 : index
    %0 = vector.load %arg1[%c0, %c0_0] : memref<16x784xbf16, #tpu.memory_space<vmem>>, vector<16x784xbf16>
    %c0_1 = arith.constant 0 : index
    %c0_2 = arith.constant 0 : index
    %1 = vector.load %arg2[%c0_1, %c0_2] : memref<784x512xbf16, #tpu.memory_space<vmem>>, vector<784x512xbf16>
    %cst = arith.constant dense<0.000000e+00> : vector<16x512xf32>
    %2 = tpu.matmul %0, %1, %cst {dimension_numbers = #tpu.dot_dimension_numbers<[1], [0], [0], [1], [0, 0, 1, 1], [], []>} : vector<16x784xbf16>, vector<784x512xbf16>, vector<16x512xf32> -> vector<16x512xf32>
    %c0_3 = arith.constant 0 : index
    %c0_4 = arith.constant 0 : index
    %3 = vector.load %arg3[%c0_3, %c0_4] : memref<1x512xf32, #tpu.memory_space<vmem>>, vector<1x512xf32>
    %4 = vector.broadcast %3 : vector<1x512xf32> to vector<16x512xf32>
    %5 = arith.addf %2, %4 : vector<16x512xf32>
    %cst_5 = arith.constant 0.000000e+00 : f32
    %6 = vector.broadcast %cst_5 : f32 to vector<16x512xf32>
    %7 = arith.maximumf %5, %6 : vector<16x512xf32>
    %8 = arith.truncf %7 : vector<16x512xf32> to vector<16x512xbf16>
    %c0_6 = arith.constant 0 : index
    %c0_7 = arith.constant 0 : index
    %9 = vector.load %arg4[%c0_6, %c0_7] : memref<512x256xbf16, #tpu.memory_space<vmem>>, vector<512x256xbf16>
    %cst_8 = arith.constant dense<0.000000e+00> : vector<16x256xf32>
    %10 = tpu.matmul %8, %9, %cst_8 {dimension_numbers = #tpu.dot_dimension_numbers<[1], [0], [0], [1], [0, 0, 1, 1], [], []>} : vector<16x512xbf16>, vector<512x256xbf16>, vector<16x256xf32> -> vector<16x256xf32>
    %c0_9 = arith.constant 0 : index
    %c0_10 = arith.constant 0 : index
    %11 = vector.load %arg5[%c0_9, %c0_10] : memref<1x256xf32, #tpu.memory_space<vmem>>, vector<1x256xf32>
    %12 = vector.broadcast %11 : vector<1x256xf32> to vector<16x256xf32>
    %13 = arith.addf %10, %12 : vector<16x256xf32>
    %cst_11 = arith.constant 0.000000e+00 : f32
    %14 = vector.broadcast %cst_11 : f32 to vector<16x256xf32>
    %15 = arith.maximumf %13, %14 : vector<16x256xf32>
    %16 = arith.truncf %15 : vector<16x256xf32> to vector<16x256xbf16>
    %c0_12 = arith.constant 0 : index
    %c0_13 = arith.constant 0 : index
    %17 = vector.load %arg6[%c0_12, %c0_13] : memref<256x128xbf16, #tpu.memory_space<vmem>>, vector<256x128xbf16>
    %cst_14 = arith.constant dense<0.000000e+00> : vector<16x128xf32>
    %18 = tpu.matmul %16, %17, %cst_14 {dimension_numbers = #tpu.dot_dimension_numbers<[1], [0], [0], [1], [0, 0, 1, 1], [], []>} : vector<16x256xbf16>, vector<256x128xbf16>, vector<16x128xf32> -> vector<16x128xf32>
    %c0_15 = arith.constant 0 : index
    %c0_16 = arith.constant 0 : index
    %19 = vector.load %arg7[%c0_15, %c0_16] : memref<1x128xf32, #tpu.memory_space<vmem>>, vector<1x128xf32>
    %20 = vector.broadcast %19 : vector<1x128xf32> to vector<16x128xf32>
    %21 = arith.addf %18, %20 : vector<16x128xf32>
    %cst_17 = arith.constant 0.000000e+00 : f32
    %22 = vector.broadcast %cst_17 : f32 to vector<16x128xf32>
    %23 = arith.maximumf %21, %22 : vector<16x128xf32>
    %24 = arith.truncf %23 : vector<16x128xf32> to vector<16x128xbf16>
    %c0_18 = arith.constant 0 : index
    %c0_19 = arith.constant 0 : index
    %25 = vector.load %arg8[%c0_18, %c0_19] : memref<128x64xbf16, #tpu.memory_space<vmem>>, vector<128x64xbf16>
    %cst_20 = arith.constant dense<0.000000e+00> : vector<16x64xf32>
    %26 = tpu.matmul %24, %25, %cst_20 {dimension_numbers = #tpu.dot_dimension_numbers<[1], [0], [0], [1], [0, 0, 1, 1], [], []>} : vector<16x128xbf16>, vector<128x64xbf16>, vector<16x64xf32> -> vector<16x64xf32>
    %c0_21 = arith.constant 0 : index
    %c0_22 = arith.constant 0 : index
    %27 = vector.load %arg9[%c0_21, %c0_22] : memref<1x64xf32, #tpu.memory_space<vmem>>, vector<1x64xf32>
    %28 = vector.broadcast %27 : vector<1x64xf32> to vector<16x64xf32>
    %29 = arith.addf %26, %28 : vector<16x64xf32>
    %cst_23 = arith.constant 0.000000e+00 : f32
    %30 = vector.broadcast %cst_23 : f32 to vector<16x64xf32>
    %31 = arith.maximumf %29, %30 : vector<16x64xf32>
    %32 = arith.truncf %31 : vector<16x64xf32> to vector<16x64xbf16>
    %c0_24 = arith.constant 0 : index
    %c0_25 = arith.constant 0 : index
    %33 = vector.load %arg10[%c0_24, %c0_25] : memref<64x32xbf16, #tpu.memory_space<vmem>>, vector<64x32xbf16>
    %cst_26 = arith.constant dense<0.000000e+00> : vector<16x32xf32>
    %34 = tpu.matmul %32, %33, %cst_26 {dimension_numbers = #tpu.dot_dimension_numbers<[1], [0], [0], [1], [0, 0, 1, 1], [], []>} : vector<16x64xbf16>, vector<64x32xbf16>, vector<16x32xf32> -> vector<16x32xf32>
    %c0_27 = arith.constant 0 : index
    %c0_28 = arith.constant 0 : index
    %35 = vector.load %arg11[%c0_27, %c0_28] : memref<1x32xf32, #tpu.memory_space<vmem>>, vector<1x32xf32>
    %36 = vector.broadcast %35 : vector<1x32xf32> to vector<16x32xf32>
    %37 = arith.addf %34, %36 : vector<16x32xf32>
    %cst_29 = arith.constant 0.000000e+00 : f32
    %38 = vector.broadcast %cst_29 : f32 to vector<16x32xf32>
    %39 = arith.maximumf %37, %38 : vector<16x32xf32>
    %40 = arith.truncf %39 : vector<16x32xf32> to vector<16x32xbf16>
    %c0_30 = arith.constant 0 : index
    %c0_31 = arith.constant 0 : index
    %41 = vector.load %arg12[%c0_30, %c0_31] : memref<32x128xbf16, #tpu.memory_space<vmem>>, vector<32x128xbf16>
    %cst_32 = arith.constant dense<0.000000e+00> : vector<16x128xf32>
    %42 = tpu.matmul %40, %41, %cst_32 {dimension_numbers = #tpu.dot_dimension_numbers<[1], [0], [0], [1], [0, 0, 1, 1], [], []>} : vector<16x32xbf16>, vector<32x128xbf16>, vector<16x128xf32> -> vector<16x128xf32>
    %c0_33 = arith.constant 0 : index
    %c0_34 = arith.constant 0 : index
    %43 = vector.load %arg13[%c0_33, %c0_34] : memref<1x128xf32, #tpu.memory_space<vmem>>, vector<1x128xf32>
    %44 = vector.broadcast %43 : vector<1x128xf32> to vector<16x128xf32>
    %45 = arith.addf %42, %44 : vector<16x128xf32>
    %cst_35 = arith.constant dense<0xFF800000> : vector<16xf32>
    %46 = vector.multi_reduction <maximumf>, %45, %cst_35 [1] : vector<16x128xf32> to vector<16xf32>
    %47 = vector.shape_cast %46 : vector<16xf32> to vector<16x1xf32>
    %48 = vector.broadcast %47 : vector<16x1xf32> to vector<16x128xf32>
    %49 = arith.subf %45, %48 : vector<16x128xf32>
    %50 = math.exp %49 : vector<16x128xf32>
    %cst_36 = arith.constant dense<0.000000e+00> : vector<16xf32>
    %51 = vector.multi_reduction <add>, %50, %cst_36 [1] : vector<16x128xf32> to vector<16xf32>
    %52 = vector.shape_cast %51 : vector<16xf32> to vector<16x1xf32>
    %53 = math.log %52 : vector<16x1xf32>
    %54 = vector.broadcast %53 : vector<16x1xf32> to vector<16x128xf32>
    %55 = arith.subf %49, %54 : vector<16x128xf32>
    %c0_37 = arith.constant 0 : index
    %c0_38 = arith.constant 0 : index
    %56 = vector.load %arg14[%c0_37, %c0_38] : memref<16x128xf32, #tpu.memory_space<vmem>>, vector<16x128xf32>
    tpu.vector_store %arg14[%c0_37, %c0_38], %55 {strides = array<i32>} : memref<16x128xf32, #tpu.memory_space<vmem>>, vector<16x128xf32>,
    return
  }
  func.func @transform_0(%arg0: i32) -> (i32, i32) {
    %c0_i32 = arith.constant 0 : i32
    %c0_i32_0 = arith.constant 0 : i32
    return %arg0, %c0_i32 : i32, i32
  }
  func.func @transform_1(%arg0: i32) -> (i32, i32) {
    %c0_i32 = arith.constant 0 : i32
    %c0_i32_0 = arith.constant 0 : i32
    %c0_i32_1 = arith.constant 0 : i32
    return %c0_i32, %c0_i32_0 : i32, i32
  }
  func.func @transform_2(%arg0: i32) -> (i32, i32) {
    %c0_i32 = arith.constant 0 : i32
    %c0_i32_0 = arith.constant 0 : i32
    %c0_i32_1 = arith.constant 0 : i32
    return %c0_i32, %c0_i32_0 : i32, i32
  }
  func.func @transform_3(%arg0: i32) -> (i32, i32) {
    %c0_i32 = arith.constant 0 : i32
    %c0_i32_0 = arith.constant 0 : i32
    %c0_i32_1 = arith.constant 0 : i32
    return %c0_i32, %c0_i32_0 : i32, i32
  }
  func.func @transform_4(%arg0: i32) -> (i32, i32) {
    %c0_i32 = arith.constant 0 : i32
    %c0_i32_0 = arith.constant 0 : i32
    %c0_i32_1 = arith.constant 0 : i32
    return %c0_i32, %c0_i32_0 : i32, i32
  }
  func.func @transform_5(%arg0: i32) -> (i32, i32) {
    %c0_i32 = arith.constant 0 : i32
    %c0_i32_0 = arith.constant 0 : i32
    %c0_i32_1 = arith.constant 0 : i32
    return %c0_i32, %c0_i32_0 : i32, i32
  }
  func.func @transform_6(%arg0: i32) -> (i32, i32) {
    %c0_i32 = arith.constant 0 : i32
    %c0_i32_0 = arith.constant 0 : i32
    %c0_i32_1 = arith.constant 0 : i32
    return %c0_i32, %c0_i32_0 : i32, i32
  }
  func.func @transform_7(%arg0: i32) -> (i32, i32) {
    %c0_i32 = arith.constant 0 : i32
    %c0_i32_0 = arith.constant 0 : i32
    %c0_i32_1 = arith.constant 0 : i32
    return %c0_i32, %c0_i32_0 : i32, i32
  }
  func.func @transform_8(%arg0: i32) -> (i32, i32) {
    %c0_i32 = arith.constant 0 : i32
    %c0_i32_0 = arith.constant 0 : i32
    %c0_i32_1 = arith.constant 0 : i32
    return %c0_i32, %c0_i32_0 : i32, i32
  }
  func.func @transform_9(%arg0: i32) -> (i32, i32) {
    %c0_i32 = arith.constant 0 : i32
    %c0_i32_0 = arith.constant 0 : i32
    %c0_i32_1 = arith.constant 0 : i32
    return %c0_i32, %c0_i32_0 : i32, i32
  }
  func.func @transform_10(%arg0: i32) -> (i32, i32) {
    %c0_i32 = arith.constant 0 : i32
    %c0_i32_0 = arith.constant 0 : i32
    %c0_i32_1 = arith.constant 0 : i32
    return %c0_i32, %c0_i32_0 : i32, i32
  }
  func.func @transform_11(%arg0: i32) -> (i32, i32) {
    %c0_i32 = arith.constant 0 : i32
    %c0_i32_0 = arith.constant 0 : i32
    %c0_i32_1 = arith.constant 0 : i32
    return %c0_i32, %c0_i32_0 : i32, i32
  }
  func.func @transform_12(%arg0: i32) -> (i32, i32) {
    %c0_i32 = arith.constant 0 : i32
    %c0_i32_0 = arith.constant 0 : i32
    %c0_i32_1 = arith.constant 0 : i32
    return %c0_i32, %c0_i32_0 : i32, i32
  }
  func.func @transform_13(%arg0: i32) -> (i32, i32) {
    %c0_i32 = arith.constant 0 : i32
    %c0_i32_0 = arith.constant 0 : i32
    return %arg0, %c0_i32 : i32, i32
  }
}

</mosaic_0001>

<llo_original>
// kernel: _forward.1
$region0: #{_forward.1}
  #allocation0 [shape = 'u32[]', space=smem, size = 0x4, offset = 0x4, fixed_abs, tag = 'smem constant byte address 0x4 - core index']
  #allocation1 [shape = 'u32[72,128]{1,0:T(1,128)}', space=vmem, size = 0x9000, scoped, tag = 'internal scratch']
  %s0 = inlined_call_operand.vmem [shape: bf16[16,784], index: 0, kind: input, shape index: {}]
  %s1 = inlined_call_operand.hbm [shape: bf16[784,512], index: 1, kind: input, shape index: {}]
  %s2 = inlined_call_operand.vmem [shape: f32[1,512], index: 2, kind: input, shape index: {}]
  %s3 = inlined_call_operand.vmem [shape: bf16[512,256], index: 3, kind: input, shape index: {}]
  %s4 = inlined_call_operand.vmem [shape: f32[1,256], index: 4, kind: input, shape index: {}]
  %s5 = inlined_call_operand.vmem [shape: bf16[256,128], index: 5, kind: input, shape index: {}]
  %s6 = inlined_call_operand.vmem [shape: f32[1,128], index: 6, kind: input, shape index: {}]
  %s7 = inlined_call_operand.vmem [shape: bf16[128,64], index: 7, kind: input, shape index: {}]
  %s8 = inlined_call_operand.vmem [shape: f32[1,64], index: 8, kind: input, shape index: {}]
  %s9 = inlined_call_operand.vmem [shape: bf16[64,32], index: 9, kind: input, shape index: {}]
  %s10 = inlined_call_operand.vmem [shape: f32[1,32], index: 10, kind: input, shape index: {}]
  %s11 = inlined_call_operand.vmem [shape: bf16[32,128], index: 11, kind: input, shape index: {}]
  %s12 = inlined_call_operand.vmem [shape: f32[1,128], index: 12, kind: input, shape index: {}]
  %s13 = inlined_call_operand.vmem [shape: f32[16,128], index: 13, kind: output, shape index: {}]
  %s14 = sld [smem:[#allocation0]]
  $region66: #{_forward.1} parent=0
    _
  %s16 = ssub.s32 1, %s14
  %s17 = scalar_select 0, %s16, %s14
  $region1: #{_forward.1} parent=0
    #allocation2 [shape = 'u8[802816]{0}', space=vmem, size = 0xc4000, scoped, tag = 'input window, operand 1, single buffered']
    #allocation3 [shape = 's32[1]{0}', space=sflag, size = 0x4, scoped, tag = 'scoped memory for _forward.1']
    %18 = vsyncpa [#allocation3], 0
    // Predicated region
    $region2: #{_forward.1} parent=1 // pred_check
      _
    $region3: #{_forward.1} parent=1 // pred_check_branch
      %20 = sbr.rel (0) target = $region5
    $region4: #{_forward.1} parent=1 // pred_region
      _
    $region5: #{_forward.1} parent=1 // pred_fallthru
      _
    // Predicated region
    $region6: #{_forward.1} parent=1 // pred_check
      _
    $region7: #{_forward.1} parent=1 // pred_check_branch
      %22 = sbr.rel (0) target = $region9
    $region8: #{_forward.1} parent=1 // pred_region
      %24 = vsyncadd [#allocation3], 0
      %s25 = sshll.u32 %s1, 4
      %s26 = int_to_ptr.hbm [resolvable:$true] %s25
      %s27 = sshll.u32 [#allocation2], 4
      %s28 = int_to_ptr.vmem [resolvable:$true] %s27
      %33 = dma.hbm_to_vmem [thread:$0]  %s26, 25088, %s28, [#allocation3], 256, 256, 16
    $region9: #{_forward.1} parent=1 // pred_fallthru
      _
    // Predicated region
    $region10: #{_forward.1} parent=1 // pred_check
      _
    $region11: #{_forward.1} parent=1 // pred_check_branch
      %35 = sbr.rel (0) target = $region13
    $region12: #{_forward.1} parent=1 // pred_region
      _
    $region13: #{_forward.1} parent=1 // pred_fallthru
      _
    // Predicated region
    $region14: #{_forward.1} parent=1 // pred_check
      _
    $region15: #{_forward.1} parent=1 // pred_check_branch
      %37 = sbr.rel (0) target = $region17
    $region16: #{_forward.1} parent=1 // pred_region
      _
    $region17: #{_forward.1} parent=1 // pred_fallthru
      _
    // Predicated region
    $region18: #{_forward.1} parent=1 // pred_check
      _
    $region19: #{_forward.1} parent=1 // pred_check_branch
      %39 = sbr.rel (0) target = $region21
    $region20: #{_forward.1} parent=1 // pred_region
      _
    $region21: #{_forward.1} parent=1 // pred_fallthru
      _
    // Predicated region
    $region22: #{_forward.1} parent=1 // pred_check
      _
    $region23: #{_forward.1} parent=1 // pred_check_branch
      %41 = sbr.rel (0) target = $region25
    $region24: #{_forward.1} parent=1 // pred_region
      _
    $region25: #{_forward.1} parent=1 // pred_fallthru
      _
    // Predicated region
    $region26: #{_forward.1} parent=1 // pred_check
      _
    $region27: #{_forward.1} parent=1 // pred_check_branch
      %43 = sbr.rel (0) target = $region29
    $region28: #{_forward.1} parent=1 // pred_region
      _
    $region29: #{_forward.1} parent=1 // pred_fallthru
      _
    // Predicated region
    $region30: #{_forward.1} parent=1 // pred_check
      _
    $region31: #{_forward.1} parent=1 // pred_check_branch
      %45 = sbr.rel (0) target = $region33
    $region32: #{_forward.1} parent=1 // pred_region
      _
    $region33: #{_forward.1} parent=1 // pred_fallthru
      _
    // Predicated region
    $region34: #{_forward.1} parent=1 // pred_check
      _
    $region35: #{_forward.1} parent=1 // pred_check_branch
      %47 = sbr.rel (0) target = $region37
    $region36: #{_forward.1} parent=1 // pred_region
      _
    $region37: #{_forward.1} parent=1 // pred_fallthru
      _
    // Predicated region
    $region38: #{_forward.1} parent=1 // pred_check
      _
    $region39: #{_forward.1} parent=1 // pred_check_branch
      %49 = sbr.rel (0) target = $region41
    $region40: #{_forward.1} parent=1 // pred_region
      _
    $region41: #{_forward.1} parent=1 // pred_fallthru
      _
    // Predicated region
    $region42: #{_forward.1} parent=1 // pred_check
      _
    $region43: #{_forward.1} parent=1 // pred_check_branch
      %51 = sbr.rel (0) target = $region45
    $region44: #{_forward.1} parent=1 // pred_region
      _
    $region45: #{_forward.1} parent=1 // pred_fallthru
      _
    // Predicated region
    $region46: #{_forward.1} parent=1 // pred_check
      _
    $region47: #{_forward.1} parent=1 // pred_check_branch
      %53 = sbr.rel (0) target = $region49
    $region48: #{_forward.1} parent=1 // pred_region
      _
    $region49: #{_forward.1} parent=1 // pred_fallthru
      _
    // Predicated region
    $region50: #{_forward.1} parent=1 // pred_check
      _
    $region51: #{_forward.1} parent=1 // pred_check_branch
      %55 = sbr.rel (0) target = $region53
    $region52: #{_forward.1} parent=1 // pred_region
      _
    $region53: #{_forward.1} parent=1 // pred_fallthru
      _
    // Predicated region
    $region54: #{_forward.1} parent=1 // pred_check
      _
    $region55: #{_forward.1} parent=1 // pred_check_branch
      %57 = sbr.rel (0) target = $region57
    $region56: #{_forward.1} parent=1 // pred_region
      %59 = dma.done [#allocation3], 25088
    $region57: #{_forward.1} parent=1 // pred_fallthru
      _
    %v61 = vld [vmem:[%s0] sm:$0xff]
    %v62 = vld [vmem:[%s0 + $0x8] sm:$0xff]
    %v63 = vld [vmem:[%s0 + $0x10] sm:$0xff]
    %v64 = vld [vmem:[%s0 + $0x18] sm:$0xf]
    %v65 = vld [vmem:[%s0 + $0x1c] sm:$0xff]
    %v66 = vld [vmem:[%s0 + $0x24] sm:$0xff]
    %v67 = vld [vmem:[%s0 + $0x2c] sm:$0xff]
    %v68 = vld [vmem:[%s0 + $0x34] sm:$0xf]
    %v69 = vld [vmem:[#allocation2] sm:$0xff]
    %v70 = vld [vmem:[#allocation2 + $0x8] sm:$0xff]
    %v71 = vld [vmem:[#allocation2 + $0x10] sm:$0xff]
    %v72 = vld [vmem:[#allocation2 + $0x18] sm:$0xff]
    %v73 = vld [vmem:[#allocation2 + $0x20] sm:$0xff]
    %v74 = vld [vmem:[#allocation2 + $0x28] sm:$0xff]
    %v75 = vld [vmem:[#allocation2 + $0x30] sm:$0xff]
    %v76 = vld [vmem:[#allocation2 + $0x38] sm:$0xff]
    %v77 = vld [vmem:[#allocation2 + $0x40] sm:$0xff]
    %v78 = vld [vmem:[#allocation2 + $0x48] sm:$0xff]
    %v79 = vld [vmem:[#allocation2 + $0x50] sm:$0xff]
    %v80 = vld [vmem:[#allocation2 + $0x58] sm:$0xff]
    %v81 = vld [vmem:[#allocation2 + $0x60] sm:$0xff]
    %v82 = vld [vmem:[#allocation2 + $0x68] sm:$0xff]
    %v83 = vld [vmem:[#allocation2 + $0x70] sm:$0xff]
    %v84 = vld [vmem:[#allocation2 + $0x78] sm:$0xff]
    %v85 = vld [vmem:[#allocation2 + $0x80] sm:$0xff]
    %v86 = vld [vmem:[#allocation2 + $0x88] sm:$0xff]
    %v87 = vld [vmem:[#allocation2 + $0x90] sm:$0xff]
    %v88 = vld [vmem:[#allocation2 + $0x98] sm:$0xff]
    %v89 = vld [vmem:[#allocation2 + $0xa0] sm:$0xff]
    %v90 = vld [vmem:[#allocation2 + $0xa8] sm:$0xff]
    %v91 = vld [vmem:[#allocation2 + $0xb0] sm:$0xff]
    %v92 = vld [vmem:[#allocation2 + $0xb8] sm:$0xff]
    %v93 = vld [vmem:[#allocation2 + $0xc0] sm:$0xff]
    %v94 = vld [vmem:[#allocation2 + $0xc8] sm:$0xff]
    %v95 = vld [vmem:[#allocation2 + $0xd0] sm:$0xff]
    %v96 = vld [vmem:[#allocation2 + $0xd8] sm:$0xff]
    %v97 = vld [vmem:[#allocation2 + $0xe0] sm:$0xff]
    %v98 = vld [vmem:[#allocation2 + $0xe8] sm:$0xff]
    %v99 = vld [vmem:[#allocation2 + $0xf0] sm:$0xff]
    %v100 = vld [vmem:[#allocation2 + $0xf8] sm:$0xff]
    %v101 = vld [vmem:[#allocation2 + $0x100] sm:$0xff]
    %v102 = vld [vmem:[#allocation2 + $0x108] sm:$0xff]
    %v103 = vld [vmem:[#allocation2 + $0x110] sm:$0xff]
    %v104 = vld [vmem:[#allocation2 + $0x118] sm:$0xff]
    %v105 = vld [vmem:[#allocation2 + $0x120] sm:$0xff]
    %v106 = vld [vmem:[#allocation2 + $0x128] sm:$0xff]
    %v107 = vld [vmem:[#allocation2 + $0x130] sm:$0xff]
    %v108 = vld [vmem:[#allocation2 + $0x138] sm:$0xff]
    %v109 = vld [vmem:[#allocation2 + $0x140] sm:$0xff]
    %v110 = vld [vmem:[#allocation2 + $0x148] sm:$0xff]
    %v111 = vld [vmem:[#allocation2 + $0x150] sm:$0xff]
    %v112 = vld [vmem:[#allocation2 + $0x158] sm:$0xff]
    %v113 = vld [vmem:[#allocation2 + $0x160] sm:$0xff]
    %v114 = vld [vmem:[#allocation2 + $0x168] sm:$0xff]
    %v115 = vld [vmem:[#allocation2 + $0x170] sm:$0xff]
    %v116 = vld [vmem:[#allocation2 + $0x178] sm:$0xff]
    %v117 = vld [vmem:[#allocation2 + $0x180] sm:$0xff]
    %v118 = vld [vmem:[#allocation2 + $0x188] sm:$0xff]
    %v119 = vld [vmem:[#allocation2 + $0x190] sm:$0xff]
    %v120 = vld [vmem:[#allocation2 + $0x198] sm:$0xff]
    %v121 = vld [vmem:[#allocation2 + $0x1a0] sm:$0xff]
    %v122 = vld [vmem:[#allocation2 + $0x1a8] sm:$0xff]
    %v123 = vld [vmem:[#allocation2 + $0x1b0] sm:$0xff]
    %v124 = vld [vmem:[#allocation2 + $0x1b8] sm:$0xff]
    %v125 = vld [vmem:[#allocation2 + $0x1c0] sm:$0xff]
    %v126 = vld [vmem:[#allocation2 + $0x1c8] sm:$0xff]
    %v127 = vld [vmem:[#allocation2 + $0x1d0] sm:$0xff]
    %v128 = vld [vmem:[#allocation2 + $0x1d8] sm:$0xff]
    %v129 = vld [vmem:[#allocation2 + $0x1e0] sm:$0xff]
    %v130 = vld [vmem:[#allocation2 + $0x1e8] sm:$0xff]
    %v131 = vld [vmem:[#allocation2 + $0x1f0] sm:$0xff]
    %v132 = vld [vmem:[#allocation2 + $0x1f8] sm:$0xff]
    %v133 = vld [vmem:[#allocation2 + $0x200] sm:$0xff]
    %v134 = vld [vmem:[#allocation2 + $0x208] sm:$0xff]
    %v135 = vld [vmem:[#allocation2 + $0x210] sm:$0xff]
    %v136 = vld [vmem:[#allocation2 + $0x218] sm:$0xff]
    %v137 = vld [vmem:[#allocation2 + $0x220] sm:$0xff]
    %v138 = vld [vmem:[#allocation2 + $0x228] sm:$0xff]
    %v139 = vld [vmem:[#allocation2 + $0x230] sm:$0xff]
    %v140 = vld [vmem:[#allocation2 + $0x238] sm:$0xff]
    %v141 = vld [vmem:[#allocation2 + $0x240] sm:$0xff]
    %v142 = vld [vmem:[#allocation2 + $0x248] sm:$0xff]
    %v143 = vld [vmem:[#allocation2 + $0x250] sm:$0xff]
    %v144 = vld [vmem:[#allocation2 + $0x258] sm:$0xff]
    %v145 = vld [vmem:[#allocation2 + $0x260] sm:$0xff]
    %v146 = vld [vmem:[#allocation2 + $0x268] sm:$0xff]
    %v147 = vld [vmem:[#allocation2 + $0x270] sm:$0xff]
    %v148 = vld [vmem:[#allocation2 + $0x278] sm:$0xff]
    %v149 = vld [vmem:[#allocation2 + $0x280] sm:$0xff]
    %v150 = vld [vmem:[#allocation2 + $0x288] sm:$0xff]
    %v151 = vld [vmem:[#allocation2 + $0x290] sm:$0xff]
    %v152 = vld [vmem:[#allocation2 + $0x298] sm:$0xff]
    %v153 = vld [vmem:[#allocation2 + $0x2a0] sm:$0xff]
    %v154 = vld [vmem:[#allocation2 + $0x2a8] sm:$0xff]
    %v155 = vld [vmem:[#allocation2 + $0x2b0] sm:$0xff]
    %v156 = vld [vmem:[#allocation2 + $0x2b8] sm:$0xff]
    %v157 = vld [vmem:[#allocation2 + $0x2c0] sm:$0xff]
    %v158 = vld [vmem:[#allocation2 + $0x2c8] sm:$0xff]
    %v159 = vld [vmem:[#allocation2 + $0x2d0] sm:$0xff]
    %v160 = vld [vmem:[#allocation2 + $0x2d8] sm:$0xff]
    %v161 = vld [vmem:[#allocation2 + $0x2e0] sm:$0xff]
    %v162 = vld [vmem:[#allocation2 + $0x2e8] sm:$0xff]
    %v163 = vld [vmem:[#allocation2 + $0x2f0] sm:$0xff]
    %v164 = vld [vmem:[#allocation2 + $0x2f8] sm:$0xff]
    %v165 = vld [vmem:[#allocation2 + $0x300] sm:$0xff]
    %v166 = vld [vmem:[#allocation2 + $0x308] sm:$0xff]
    %v167 = vld [vmem:[#allocation2 + $0x310] sm:$0xff]
    %v168 = vld [vmem:[#allocation2 + $0x318] sm:$0xff]
    %v169 = vld [vmem:[#allocation2 + $0x320] sm:$0xff]
    %v170 = vld [vmem:[#allocation2 + $0x328] sm:$0xff]
    %v171 = vld [vmem:[#allocation2 + $0x330] sm:$0xff]
    %v172 = vld [vmem:[#allocation2 + $0x338] sm:$0xff]
    %v173 = vld [vmem:[#allocation2 + $0x340] sm:$0xff]
    %v174 = vld [vmem:[#allocation2 + $0x348] sm:$0xff]
    %v175 = vld [vmem:[#allocation2 + $0x350] sm:$0xff]
    %v176 = vld [vmem:[#allocation2 + $0x358] sm:$0xff]
    %v177 = vld [vmem:[#allocation2 + $0x360] sm:$0xff]
    %v178 = vld [vmem:[#allocation2 + $0x368] sm:$0xff]
    %v179 = vld [vmem:[#allocation2 + $0x370] sm:$0xff]
    %v180 = vld [vmem:[#allocation2 + $0x378] sm:$0xff]
    %v181 = vld [vmem:[#allocation2 + $0x380] sm:$0xff]
    %v182 = vld [vmem:[#allocation2 + $0x388] sm:$0xff]
    %v183 = vld [vmem:[#allocation2 + $0x390] sm:$0xff]
    %v184 = vld [vmem:[#allocation2 + $0x398] sm:$0xff]
    %v185 = vld [vmem:[#allocation2 + $0x3a0] sm:$0xff]
    %v186 = vld [vmem:[#allocation2 + $0x3a8] sm:$0xff]
    %v187 = vld [vmem:[#allocation2 + $0x3b0] sm:$0xff]
    %v188 = vld [vmem:[#allocation2 + $0x3b8] sm:$0xff]
    %v189 = vld [vmem:[#allocation2 + $0x3c0] sm:$0xff]
    %v190 = vld [vmem:[#allocation2 + $0x3c8] sm:$0xff]
    %v191 = vld [vmem:[#allocation2 + $0x3d0] sm:$0xff]
    %v192 = vld [vmem:[#allocation2 + $0x3d8] sm:$0xff]
    %v193 = vld [vmem:[#allocation2 + $0x3e0] sm:$0xff]
    %v194 = vld [vmem:[#allocation2 + $0x3e8] sm:$0xff]
    %v195 = vld [vmem:[#allocation2 + $0x3f0] sm:$0xff]
    %v196 = vld [vmem:[#allocation2 + $0x3f8] sm:$0xff]
    %v197 = vld [vmem:[#allocation2 + $0x400] sm:$0xff]
    %v198 = vld [vmem:[#allocation2 + $0x408] sm:$0xff]
    %v199 = vld [vmem:[#allocation2 + $0x410] sm:$0xff]
    %v200 = vld [vmem:[#allocation2 + $0x418] sm:$0xff]
    %v201 = vld [vmem:[#allocation2 + $0x420] sm:$0xff]
    %v202 = vld [vmem:[#allocation2 + $0x428] sm:$0xff]
    %v203 = vld [vmem:[#allocation2 + $0x430] sm:$0xff]
    %v204 = vld [vmem:[#allocation2 + $0x438] sm:$0xff]
    %v205 = vld [vmem:[#allocation2 + $0x440] sm:$0xff]
    %v206 = vld [vmem:[#allocation2 + $0x448] sm:$0xff]
    %v207 = vld [vmem:[#allocation2 + $0x450] sm:$0xff]
    %v208 = vld [vmem:[#allocation2 + $0x458] sm:$0xff]
    %v209 = vld [vmem:[#allocation2 + $0x460] sm:$0xff]
    %v210 = vld [vmem:[#allocation2 + $0x468] sm:$0xff]
    %v211 = vld [vmem:[#allocation2 + $0x470] sm:$0xff]
    %v212 = vld [vmem:[#allocation2 + $0x478] sm:$0xff]
    %v213 = vld [vmem:[#allocation2 + $0x480] sm:$0xff]
    %v214 = vld [vmem:[#allocation2 + $0x488] sm:$0xff]
    %v215 = vld [vmem:[#allocation2 + $0x490] sm:$0xff]
    %v216 = vld [vmem:[#allocation2 + $0x498] sm:$0xff]
    %v217 = vld [vmem:[#allocation2 + $0x4a0] sm:$0xff]
    %v218 = vld [vmem:[#allocation2 + $0x4a8] sm:$0xff]
    %v219 = vld [vmem:[#allocation2 + $0x4b0] sm:$0xff]
    %v220 = vld [vmem:[#allocation2 + $0x4b8] sm:$0xff]
    %v221 = vld [vmem:[#allocation2 + $0x4c0] sm:$0xff]
    %v222 = vld [vmem:[#allocation2 + $0x4c8] sm:$0xff]
    %v223 = vld [vmem:[#allocation2 + $0x4d0] sm:$0xff]
    %v224 = vld [vmem:[#allocation2 + $0x4d8] sm:$0xff]
    %v225 = vld [vmem:[#allocation2 + $0x4e0] sm:$0xff]
    %v226 = vld [vmem:[#allocation2 + $0x4e8] sm:$0xff]
    %v227 = vld [vmem:[#allocation2 + $0x4f0] sm:$0xff]
    %v228 = vld [vmem:[#allocation2 + $0x4f8] sm:$0xff]
    %v229 = vld [vmem:[#allocation2 + $0x500] sm:$0xff]
    %v230 = vld [vmem:[#allocation2 + $0x508] sm:$0xff]
    %v231 = vld [vmem:[#allocation2 + $0x510] sm:$0xff]
    %v232 = vld [vmem:[#allocation2 + $0x518] sm:$0xff]
    %v233 = vld [vmem:[#allocation2 + $0x520] sm:$0xff]
    %v234 = vld [vmem:[#allocation2 + $0x528] sm:$0xff]
    %v235 = vld [vmem:[#allocation2 + $0x530] sm:$0xff]
    %v236 = vld [vmem:[#allocation2 + $0x538] sm:$0xff]
    %v237 = vld [vmem:[#allocation2 + $0x540] sm:$0xff]
    %v238 = vld [vmem:[#allocation2 + $0x548] sm:$0xff]
    %v239 = vld [vmem:[#allocation2 + $0x550] sm:$0xff]
    %v240 = vld [vmem:[#allocation2 + $0x558] sm:$0xff]
    %v241 = vld [vmem:[#allocation2 + $0x560] sm:$0xff]
    %v242 = vld [vmem:[#allocation2 + $0x568] sm:$0xff]
    %v243 = vld [vmem:[#allocation2 + $0x570] sm:$0xff]
    %v244 = vld [vmem:[#allocation2 + $0x578] sm:$0xff]
    %v245 = vld [vmem:[#allocation2 + $0x580] sm:$0xff]
    %v246 = vld [vmem:[#allocation2 + $0x588] sm:$0xff]
    %v247 = vld [vmem:[#allocation2 + $0x590] sm:$0xff]
    %v248 = vld [vmem:[#allocation2 + $0x598] sm:$0xff]
    %v249 = vld [vmem:[#allocation2 + $0x5a0] sm:$0xff]
    %v250 = vld [vmem:[#allocation2 + $0x5a8] sm:$0xff]
    %v251 = vld [vmem:[#allocation2 + $0x5b0] sm:$0xff]
    %v252 = vld [vmem:[#allocation2 + $0x5b8] sm:$0xff]
    %v253 = vld [vmem:[#allocation2 + $0x5c0] sm:$0xff]
    %v254 = vld [vmem:[#allocation2 + $0x5c8] sm:$0xff]
    %v255 = vld [vmem:[#allocation2 + $0x5d0] sm:$0xff]
    %v256 = vld [vmem:[#allocation2 + $0x5d8] sm:$0xff]
    %v257 = vld [vmem:[#allocation2 + $0x5e0] sm:$0xff]
    %v258 = vld [vmem:[#allocation2 + $0x5e8] sm:$0xff]
    %v259 = vld [vmem:[#allocation2 + $0x5f0] sm:$0xff]
    %v260 = vld [vmem:[#allocation2 + $0x5f8] sm:$0xff]
    %v261 = vld [vmem:[#allocation2 + $0x600] sm:$0xff]
    %v262 = vld [vmem:[#allocation2 + $0x608] sm:$0xff]
    %v263 = vld [vmem:[#allocation2 + $0x610] sm:$0xff]
    %v264 = vld [vmem:[#allocation2 + $0x618] sm:$0xff]
    %v265 = vld [vmem:[%s2] sm:$0xf]
    %v267 = vperm.slane %v265, 0
    %v268 = vperm.slane %v265, 1
    %v269 = vperm.slane %v265, 2
    %v270 = vperm.slane %v265, 3
    %v283 = vunpack.c.l.b16 %v61
    %v284 = vunpack.c.h.b16 %v61
    %v285 = vunpack.c.l.b16 %v62
    %v286 = vunpack.c.h.b16 %v62
    %v287 = vunpack.c.l.b16 %v63
    %v288 = vunpack.c.h.b16 %v63
    %v289 = vunpack.c.l.b16 %v64
    %v290 = vunpack.c.l.b16 %v65
    %v291 = vunpack.c.h.b16 %v65
    %v292 = vunpack.c.l.b16 %v66
    %v293 = vunpack.c.h.b16 %v66
    %v294 = vunpack.c.l.b16 %v67
    %v295 = vunpack.c.h.b16 %v67
    %v296 = vunpack.c.l.b16 %v68
    %v297 = vpack.c.b16 %v290, %v283
    %v298 = vpack.c.b16 %v291, %v284
    %v299 = vpack.c.b16 %v292, %v285
    %v300 = vpack.c.b16 %v293, %v286
    %v301 = vpack.c.b16 %v294, %v287
    %v302 = vpack.c.b16 %v295, %v288
    %v303 = vpack.c.b16 %v296, %v289
    %v506 = vunpack.c.l.b16 %v69
    %v507 = vunpack.c.h.b16 %v69
    %v508 = vunpack.c.l.b16 %v70
    %v509 = vunpack.c.h.b16 %v70
    %v510 = vunpack.c.l.b16 %v71
    %v511 = vunpack.c.h.b16 %v71
    %v512 = vunpack.c.l.b16 %v72
    %v513 = vunpack.c.h.b16 %v72
    %v514 = vunpack.c.l.b16 %v73
    %v515 = vunpack.c.h.b16 %v73
    %v516 = vunpack.c.l.b16 %v74
    %v517 = vunpack.c.h.b16 %v74
    %v518 = vunpack.c.l.b16 %v75
    %v519 = vunpack.c.h.b16 %v75
    %v520 = vunpack.c.l.b16 %v76
    %v521 = vunpack.c.h.b16 %v76
    %v522 = vunpack.c.l.b16 %v77
    %v523 = vunpack.c.h.b16 %v77
    %v524 = vunpack.c.l.b16 %v78
    %v525 = vunpack.c.h.b16 %v78
    %v526 = vunpack.c.l.b16 %v79
    %v527 = vunpack.c.h.b16 %v79
    %v528 = vunpack.c.l.b16 %v80
    %v529 = vunpack.c.h.b16 %v80
    %v530 = vunpack.c.l.b16 %v81
    %v531 = vunpack.c.h.b16 %v81
    %v532 = vunpack.c.l.b16 %v82
    %v533 = vunpack.c.h.b16 %v82
    %v534 = vunpack.c.l.b16 %v83
    %v535 = vunpack.c.h.b16 %v83
    %v536 = vunpack.c.l.b16 %v84
    %v537 = vunpack.c.h.b16 %v84
    %v538 = vunpack.c.l.b16 %v85
    %v539 = vunpack.c.h.b16 %v85
    %v540 = vunpack.c.l.b16 %v86
    %v541 = vunpack.c.h.b16 %v86
    %v542 = vunpack.c.l.b16 %v87
    %v543 = vunpack.c.h.b16 %v87
    %v544 = vunpack.c.l.b16 %v88
    %v545 = vunpack.c.h.b16 %v88
    %v546 = vunpack.c.l.b16 %v89
    %v547 = vunpack.c.h.b16 %v89
    %v548 = vunpack.c.l.b16 %v90
    %v549 = vunpack.c.h.b16 %v90
    %v550 = vunpack.c.l.b16 %v91
    %v551 = vunpack.c.h.b16 %v91
    %v552 = vunpack.c.l.b16 %v92
    %v553 = vunpack.c.h.b16 %v92
    %v554 = vunpack.c.l.b16 %v93
    %v555 = vunpack.c.h.b16 %v93
    %v556 = vunpack.c.l.b16 %v94
    %v557 = vunpack.c.h.b16 %v94
    %v558 = vunpack.c.l.b16 %v95
    %v559 = vunpack.c.h.b16 %v95
    %v560 = vunpack.c.l.b16 %v96
    %v561 = vunpack.c.h.b16 %v96
    %v562 = vunpack.c.l.b16 %v97
    %v563 = vunpack.c.h.b16 %v97
    %v564 = vunpack.c.l.b16 %v98
    %v565 = vunpack.c.h.b16 %v98
    %v566 = vunpack.c.l.b16 %v99
    %v567 = vunpack.c.h.b16 %v99
    %v568 = vunpack.c.l.b16 %v100
    %v569 = vunpack.c.h.b16 %v100
    %v570 = vunpack.c.l.b16 %v101
    %v571 = vunpack.c.h.b16 %v101
    %v572 = vunpack.c.l.b16 %v102
    %v573 = vunpack.c.h.b16 %v102
    %v574 = vunpack.c.l.b16 %v103
    %v575 = vunpack.c.h.b16 %v103
    %v576 = vunpack.c.l.b16 %v104
    %v577 = vunpack.c.h.b16 %v104
    %v578 = vunpack.c.l.b16 %v105
    %v579 = vunpack.c.h.b16 %v105
    %v580 = vunpack.c.l.b16 %v106
    %v581 = vunpack.c.h.b16 %v106
    %v582 = vunpack.c.l.b16 %v107
    %v583 = vunpack.c.h.b16 %v107
    %v584 = vunpack.c.l.b16 %v108
    %v585 = vunpack.c.h.b16 %v108
    %v586 = vunpack.c.l.b16 %v109
    %v587 = vunpack.c.h.b16 %v109
    %v588 = vunpack.c.l.b16 %v110
    %v589 = vunpack.c.h.b16 %v110
    %v590 = vunpack.c.l.b16 %v111
    %v591 = vunpack.c.h.b16 %v111
    %v592 = vunpack.c.l.b16 %v112
    %v593 = vunpack.c.h.b16 %v112
    %v594 = vunpack.c.l.b16 %v113
    %v595 = vunpack.c.h.b16 %v113
    %v596 = vunpack.c.l.b16 %v114
    %v597 = vunpack.c.h.b16 %v114
    %v598 = vunpack.c.l.b16 %v115
    %v599 = vunpack.c.h.b16 %v115
    %v600 = vunpack.c.l.b16 %v116
    %v601 = vunpack.c.h.b16 %v116
    %v602 = vunpack.c.l.b16 %v117
    %v603 = vunpack.c.h.b16 %v117
    %v604 = vunpack.c.l.b16 %v118
    %v605 = vunpack.c.h.b16 %v118
    %v606 = vunpack.c.l.b16 %v119
    %v607 = vunpack.c.h.b16 %v119
    %v608 = vunpack.c.l.b16 %v120
    %v609 = vunpack.c.h.b16 %v120
    %v610 = vunpack.c.l.b16 %v121
    %v611 = vunpack.c.h.b16 %v121
    %v612 = vunpack.c.l.b16 %v122
    %v613 = vunpack.c.h.b16 %v122
    %v614 = vunpack.c.l.b16 %v123
    %v615 = vunpack.c.h.b16 %v123
    %v616 = vunpack.c.l.b16 %v124
    %v617 = vunpack.c.h.b16 %v124
    %v618 = vunpack.c.l.b16 %v125
    %v619 = vunpack.c.h.b16 %v125
    %v620 = vunpack.c.l.b16 %v126
    %v621 = vunpack.c.h.b16 %v126
    %v622 = vunpack.c.l.b16 %v127
    %v623 = vunpack.c.h.b16 %v127
    %v624 = vunpack.c.l.b16 %v128
    %v625 = vunpack.c.h.b16 %v128
    %v626 = vunpack.c.l.b16 %v129
    %v627 = vunpack.c.h.b16 %v129
    %v628 = vunpack.c.l.b16 %v130
    %v629 = vunpack.c.h.b16 %v130
    %v630 = vunpack.c.l.b16 %v131
    %v631 = vunpack.c.h.b16 %v131
    %v632 = vunpack.c.l.b16 %v132
    %v633 = vunpack.c.h.b16 %v132
    %v634 = vunpack.c.l.b16 %v133
    %v635 = vunpack.c.h.b16 %v133
    %v636 = vunpack.c.l.b16 %v134
    %v637 = vunpack.c.h.b16 %v134
    %v638 = vunpack.c.l.b16 %v135
    %v639 = vunpack.c.h.b16 %v135
    %v640 = vunpack.c.l.b16 %v136
    %v641 = vunpack.c.h.b16 %v136
    %v642 = vunpack.c.l.b16 %v137
    %v643 = vunpack.c.h.b16 %v137
    %v644 = vunpack.c.l.b16 %v138
    %v645 = vunpack.c.h.b16 %v138
    %v646 = vunpack.c.l.b16 %v139
    %v647 = vunpack.c.h.b16 %v139
    %v648 = vunpack.c.l.b16 %v140
    %v649 = vunpack.c.h.b16 %v140
    %v650 = vunpack.c.l.b16 %v141
    %v651 = vunpack.c.h.b16 %v141
    %v652 = vunpack.c.l.b16 %v142
    %v653 = vunpack.c.h.b16 %v142
    %v654 = vunpack.c.l.b16 %v143
    %v655 = vunpack.c.h.b16 %v143
    %v656 = vunpack.c.l.b16 %v144
    %v657 = vunpack.c.h.b16 %v144
    %v658 = vunpack.c.l.b16 %v145
    %v659 = vunpack.c.h.b16 %v145
    %v660 = vunpack.c.l.b16 %v146
    %v661 = vunpack.c.h.b16 %v146
    %v662 = vunpack.c.l.b16 %v147
    %v663 = vunpack.c.h.b16 %v147
    %v664 = vunpack.c.l.b16 %v148
    %v665 = vunpack.c.h.b16 %v148
    %v666 = vunpack.c.l.b16 %v149
    %v667 = vunpack.c.h.b16 %v149
    %v668 = vunpack.c.l.b16 %v150
    %v669 = vunpack.c.h.b16 %v150
    %v670 = vunpack.c.l.b16 %v151
    %v671 = vunpack.c.h.b16 %v151
    %v672 = vunpack.c.l.b16 %v152
    %v673 = vunpack.c.h.b16 %v152
    %v674 = vunpack.c.l.b16 %v153
    %v675 = vunpack.c.h.b16 %v153
    %v676 = vunpack.c.l.b16 %v154
    %v677 = vunpack.c.h.b16 %v154
    %v678 = vunpack.c.l.b16 %v155
    %v679 = vunpack.c.h.b16 %v155
    %v680 = vunpack.c.l.b16 %v156
    %v681 = vunpack.c.h.b16 %v156
    %v682 = vunpack.c.l.b16 %v157
    %v683 = vunpack.c.h.b16 %v157
    %v684 = vunpack.c.l.b16 %v158
    %v685 = vunpack.c.h.b16 %v158
    %v686 = vunpack.c.l.b16 %v159
    %v687 = vunpack.c.h.b16 %v159
    %v688 = vunpack.c.l.b16 %v160
    %v689 = vunpack.c.h.b16 %v160
    %v690 = vunpack.c.l.b16 %v161
    %v691 = vunpack.c.h.b16 %v161
    %v692 = vunpack.c.l.b16 %v162
    %v693 = vunpack.c.h.b16 %v162
    %v694 = vunpack.c.l.b16 %v163
    %v695 = vunpack.c.h.b16 %v163
    %v696 = vunpack.c.l.b16 %v164
    %v697 = vunpack.c.h.b16 %v164
    %v698 = vunpack.c.l.b16 %v165
    %v699 = vunpack.c.h.b16 %v165
    %v700 = vunpack.c.l.b16 %v166
    %v701 = vunpack.c.h.b16 %v166
    %v702 = vunpack.c.l.b16 %v167
    %v703 = vunpack.c.h.b16 %v167
    %v704 = vunpack.c.l.b16 %v168
    %v705 = vunpack.c.h.b16 %v168
    %v706 = vunpack.c.l.b16 %v169
    %v707 = vunpack.c.h.b16 %v169
    %v708 = vunpack.c.l.b16 %v170
    %v709 = vunpack.c.h.b16 %v170
    %v710 = vunpack.c.l.b16 %v171
    %v711 = vunpack.c.h.b16 %v171
    %v712 = vunpack.c.l.b16 %v172
    %v713 = vunpack.c.h.b16 %v172
    %v714 = vunpack.c.l.b16 %v173
    %v715 = vunpack.c.h.b16 %v173
    %v716 = vunpack.c.l.b16 %v174
    %v717 = vunpack.c.h.b16 %v174
    %v718 = vunpack.c.l.b16 %v175
    %v719 = vunpack.c.h.b16 %v175
    %v720 = vunpack.c.l.b16 %v176
    %v721 = vunpack.c.h.b16 %v176
    %v722 = vunpack.c.l.b16 %v177
    %v723 = vunpack.c.h.b16 %v177
    %v724 = vunpack.c.l.b16 %v178
    %v725 = vunpack.c.h.b16 %v178
    %v726 = vunpack.c.l.b16 %v179
    %v727 = vunpack.c.h.b16 %v179
    %v728 = vunpack.c.l.b16 %v180
    %v729 = vunpack.c.h.b16 %v180
    %v730 = vunpack.c.l.b16 %v181
    %v731 = vunpack.c.h.b16 %v181
    %v732 = vunpack.c.l.b16 %v182
    %v733 = vunpack.c.h.b16 %v182
    %v734 = vunpack.c.l.b16 %v183
    %v735 = vunpack.c.h.b16 %v183
    %v736 = vunpack.c.l.b16 %v184
    %v737 = vunpack.c.h.b16 %v184
    %v738 = vunpack.c.l.b16 %v185
    %v739 = vunpack.c.h.b16 %v185
    %v740 = vunpack.c.l.b16 %v186
    %v741 = vunpack.c.h.b16 %v186
    %v742 = vunpack.c.l.b16 %v187
    %v743 = vunpack.c.h.b16 %v187
    %v744 = vunpack.c.l.b16 %v188
    %v745 = vunpack.c.h.b16 %v188
    %v746 = vunpack.c.l.b16 %v189
    %v747 = vunpack.c.h.b16 %v189
    %v748 = vunpack.c.l.b16 %v190
    %v749 = vunpack.c.h.b16 %v190
    %v750 = vunpack.c.l.b16 %v191
    %v751 = vunpack.c.h.b16 %v191
    %v752 = vunpack.c.l.b16 %v192
    %v753 = vunpack.c.h.b16 %v192
    %v754 = vunpack.c.l.b16 %v193
    %v755 = vunpack.c.h.b16 %v193
    %v756 = vunpack.c.l.b16 %v194
    %v757 = vunpack.c.h.b16 %v194
    %v758 = vunpack.c.l.b16 %v195
    %v759 = vunpack.c.h.b16 %v195
    %v760 = vunpack.c.l.b16 %v196
    %v761 = vunpack.c.h.b16 %v196
    %v762 = vunpack.c.l.b16 %v197
    %v763 = vunpack.c.h.b16 %v197
    %v764 = vunpack.c.l.b16 %v198
    %v765 = vunpack.c.h.b16 %v198
    %v766 = vunpack.c.l.b16 %v199
    %v767 = vunpack.c.h.b16 %v199
    %v768 = vunpack.c.l.b16 %v200
    %v769 = vunpack.c.h.b16 %v200
    %v770 = vunpack.c.l.b16 %v201
    %v771 = vunpack.c.h.b16 %v201
    %v772 = vunpack.c.l.b16 %v202
    %v773 = vunpack.c.h.b16 %v202
    %v774 = vunpack.c.l.b16 %v203
    %v775 = vunpack.c.h.b16 %v203
    %v776 = vunpack.c.l.b16 %v204
    %v777 = vunpack.c.h.b16 %v204
    %v778 = vunpack.c.l.b16 %v205
    %v779 = vunpack.c.h.b16 %v205
    %v780 = vunpack.c.l.b16 %v206
    %v781 = vunpack.c.h.b16 %v206
    %v782 = vunpack.c.l.b16 %v207
    %v783 = vunpack.c.h.b16 %v207
    %v784 = vunpack.c.l.b16 %v208
    %v785 = vunpack.c.h.b16 %v208
    %v786 = vunpack.c.l.b16 %v209
    %v787 = vunpack.c.h.b16 %v209
    %v788 = vunpack.c.l.b16 %v210
    %v789 = vunpack.c.h.b16 %v210
    %v790 = vunpack.c.l.b16 %v211
    %v791 = vunpack.c.h.b16 %v211
    %v792 = vunpack.c.l.b16 %v212
    %v793 = vunpack.c.h.b16 %v212
    %v794 = vunpack.c.l.b16 %v213
    %v795 = vunpack.c.h.b16 %v213
    %v796 = vunpack.c.l.b16 %v214
    %v797 = vunpack.c.h.b16 %v214
    %v798 = vunpack.c.l.b16 %v215
    %v799 = vunpack.c.h.b16 %v215
    %v800 = vunpack.c.l.b16 %v216
    %v801 = vunpack.c.h.b16 %v216
    %v802 = vunpack.c.l.b16 %v217
    %v803 = vunpack.c.h.b16 %v217
    %v804 = vunpack.c.l.b16 %v218
    %v805 = vunpack.c.h.b16 %v218
    %v806 = vunpack.c.l.b16 %v219
    %v807 = vunpack.c.h.b16 %v219
    %v808 = vunpack.c.l.b16 %v220
    %v809 = vunpack.c.h.b16 %v220
    %v810 = vunpack.c.l.b16 %v221
    %v811 = vunpack.c.h.b16 %v221
    %v812 = vunpack.c.l.b16 %v222
    %v813 = vunpack.c.h.b16 %v222
    %v814 = vunpack.c.l.b16 %v223
    %v815 = vunpack.c.h.b16 %v223
    %v816 = vunpack.c.l.b16 %v224
    %v817 = vunpack.c.h.b16 %v224
    %v818 = vunpack.c.l.b16 %v225
    %v819 = vunpack.c.h.b16 %v225
    %v820 = vunpack.c.l.b16 %v226
    %v821 = vunpack.c.h.b16 %v226
    %v822 = vunpack.c.l.b16 %v227
    %v823 = vunpack.c.h.b16 %v227
    %v824 = vunpack.c.l.b16 %v228
    %v825 = vunpack.c.h.b16 %v228
    %v826 = vunpack.c.l.b16 %v229
    %v827 = vunpack.c.h.b16 %v229
    %v828 = vunpack.c.l.b16 %v230
    %v829 = vunpack.c.h.b16 %v230
    %v830 = vunpack.c.l.b16 %v231
    %v831 = vunpack.c.h.b16 %v231
    %v832 = vunpack.c.l.b16 %v232
    %v833 = vunpack.c.h.b16 %v232
    %v834 = vunpack.c.l.b16 %v233
    %v835 = vunpack.c.h.b16 %v233
    %v836 = vunpack.c.l.b16 %v234
    %v837 = vunpack.c.h.b16 %v234
    %v838 = vunpack.c.l.b16 %v235
    %v839 = vunpack.c.h.b16 %v235
    %v840 = vunpack.c.l.b16 %v236
    %v841 = vunpack.c.h.b16 %v236
    %v842 = vunpack.c.l.b16 %v237
    %v843 = vunpack.c.h.b16 %v237
    %v844 = vunpack.c.l.b16 %v238
    %v845 = vunpack.c.h.b16 %v238
    %v846 = vunpack.c.l.b16 %v239
    %v847 = vunpack.c.h.b16 %v239
    %v848 = vunpack.c.l.b16 %v240
    %v849 = vunpack.c.h.b16 %v240
    %v850 = vunpack.c.l.b16 %v241
    %v851 = vunpack.c.h.b16 %v241
    %v852 = vunpack.c.l.b16 %v242
    %v853 = vunpack.c.h.b16 %v242
    %v854 = vunpack.c.l.b16 %v243
    %v855 = vunpack.c.h.b16 %v243
    %v856 = vunpack.c.l.b16 %v244
    %v857 = vunpack.c.h.b16 %v244
    %v858 = vunpack.c.l.b16 %v245
    %v859 = vunpack.c.h.b16 %v245
    %v860 = vunpack.c.l.b16 %v246
    %v861 = vunpack.c.h.b16 %v246
    %v862 = vunpack.c.l.b16 %v247
    %v863 = vunpack.c.h.b16 %v247
    %v864 = vunpack.c.l.b16 %v248
    %v865 = vunpack.c.h.b16 %v248
    %v866 = vunpack.c.l.b16 %v249
    %v867 = vunpack.c.h.b16 %v249
    %v868 = vunpack.c.l.b16 %v250
    %v869 = vunpack.c.h.b16 %v250
    %v870 = vunpack.c.l.b16 %v251
    %v871 = vunpack.c.h.b16 %v251
    %v872 = vunpack.c.l.b16 %v252
    %v873 = vunpack.c.h.b16 %v252
    %v874 = vunpack.c.l.b16 %v253
    %v875 = vunpack.c.h.b16 %v253
    %v876 = vunpack.c.l.b16 %v254
    %v877 = vunpack.c.h.b16 %v254
    %v878 = vunpack.c.l.b16 %v255
    %v879 = vunpack.c.h.b16 %v255
    %v880 = vunpack.c.l.b16 %v256
    %v881 = vunpack.c.h.b16 %v256
    %v882 = vunpack.c.l.b16 %v257
    %v883 = vunpack.c.h.b16 %v257
    %v884 = vunpack.c.l.b16 %v258
    %v885 = vunpack.c.h.b16 %v258
    %v886 = vunpack.c.l.b16 %v259
    %v887 = vunpack.c.h.b16 %v259
    %v888 = vunpack.c.l.b16 %v260
    %v889 = vunpack.c.h.b16 %v260
    %v890 = vunpack.c.l.b16 %v261
    %v891 = vunpack.c.h.b16 %v261
    %v892 = vunpack.c.l.b16 %v262
    %v893 = vunpack.c.h.b16 %v262
    %v894 = vunpack.c.l.b16 %v263
    %v895 = vunpack.c.h.b16 %v263
    %v896 = vunpack.c.l.b16 %v264
    %v897 = vunpack.c.h.b16 %v264
    %v898 = vpack.c.b16 %v510, %v506
    %v899 = vpack.c.b16 %v511, %v507
    %v900 = vpack.c.b16 %v512, %v508
    %v901 = vpack.c.b16 %v513, %v509
    %v902 = vpack.c.b16 %v518, %v514
    %v903 = vpack.c.b16 %v519, %v515
    %v904 = vpack.c.b16 %v520, %v516
    %v905 = vpack.c.b16 %v521, %v517
    %v906 = vpack.c.b16 %v526, %v522
    %v907 = vpack.c.b16 %v527, %v523
    %v908 = vpack.c.b16 %v528, %v524
    %v909 = vpack.c.b16 %v529, %v525
    %v910 = vpack.c.b16 %v534, %v530
    %v911 = vpack.c.b16 %v535, %v531
    %v912 = vpack.c.b16 %v536, %v532
    %v913 = vpack.c.b16 %v537, %v533
    %v914 = vpack.c.b16 %v542, %v538
    %v915 = vpack.c.b16 %v543, %v539
    %v916 = vpack.c.b16 %v544, %v540
    %v917 = vpack.c.b16 %v545, %v541
    %v918 = vpack.c.b16 %v550, %v546
    %v919 = vpack.c.b16 %v551, %v547
    %v920 = vpack.c.b16 %v552, %v548
    %v921 = vpack.c.b16 %v553, %v549
    %v922 = vpack.c.b16 %v558, %v554
    %v923 = vpack.c.b16 %v559, %v555
    %v924 = vpack.c.b16 %v560, %v556
    %v925 = vpack.c.b16 %v561, %v557
    %v926 = vpack.c.b16 %v566, %v562
    %v927 = vpack.c.b16 %v567, %v563
    %v928 = vpack.c.b16 %v568, %v564
    %v929 = vpack.c.b16 %v569, %v565
    %v930 = vpack.c.b16 %v574, %v570
    %v931 = vpack.c.b16 %v575, %v571
    %v932 = vpack.c.b16 %v576, %v572
    %v933 = vpack.c.b16 %v577, %v573
    %v934 = vpack.c.b16 %v582, %v578
    %v935 = vpack.c.b16 %v583, %v579
    %v936 = vpack.c.b16 %v584, %v580
    %v937 = vpack.c.b16 %v585, %v581
    %v938 = vpack.c.b16 %v590, %v586
    %v939 = vpack.c.b16 %v591, %v587
    %v940 = vpack.c.b16 %v592, %v588
    %v941 = vpack.c.b16 %v593, %v589
    %v942 = vpack.c.b16 %v598, %v594
    %v943 = vpack.c.b16 %v599, %v595
    %v944 = vpack.c.b16 %v600, %v596
    %v945 = vpack.c.b16 %v601, %v597
    %v946 = vpack.c.b16 %v606, %v602
    %v947 = vpack.c.b16 %v607, %v603
    %v948 = vpack.c.b16 %v608, %v604
    %v949 = vpack.c.b16 %v609, %v605
    %v950 = vpack.c.b16 %v614, %v610
    %v951 = vpack.c.b16 %v615, %v611
    %v952 = vpack.c.b16 %v616, %v612
    %v953 = vpack.c.b16 %v617, %v613
    %v954 = vpack.c.b16 %v622, %v618
    %v955 = vpack.c.b16 %v623, %v619
    %v956 = vpack.c.b16 %v624, %v620
    %v957 = vpack.c.b16 %v625, %v621
    %v958 = vpack.c.b16 %v630, %v626
    %v959 = vpack.c.b16 %v631, %v627
    %v960 = vpack.c.b16 %v632, %v628
    %v961 = vpack.c.b16 %v633, %v629
    %v962 = vpack.c.b16 %v638, %v634
    %v963 = vpack.c.b16 %v639, %v635
    %v964 = vpack.c.b16 %v640, %v636
    %v965 = vpack.c.b16 %v641, %v637
    %v966 = vpack.c.b16 %v646, %v642
    %v967 = vpack.c.b16 %v647, %v643
    %v968 = vpack.c.b16 %v648, %v644
    %v969 = vpack.c.b16 %v649, %v645
    %v970 = vpack.c.b16 %v654, %v650
    %v971 = vpack.c.b16 %v655, %v651
    %v972 = vpack.c.b16 %v656, %v652
    %v973 = vpack.c.b16 %v657, %v653
    %v974 = vpack.c.b16 %v662, %v658
    %v975 = vpack.c.b16 %v663, %v659
    %v976 = vpack.c.b16 %v664, %v660
    %v977 = vpack.c.b16 %v665, %v661
    %v978 = vpack.c.b16 %v670, %v666
    %v979 = vpack.c.b16 %v671, %v667
    %v980 = vpack.c.b16 %v672, %v668
    %v981 = vpack.c.b16 %v673, %v669
    %v982 = vpack.c.b16 %v678, %v674
    %v983 = vpack.c.b16 %v679, %v675
    %v984 = vpack.c.b16 %v680, %v676
    %v985 = vpack.c.b16 %v681, %v677
    %v986 = vpack.c.b16 %v686, %v682
    %v987 = vpack.c.b16 %v687, %v683
    %v988 = vpack.c.b16 %v688, %v684
    %v989 = vpack.c.b16 %v689, %v685
    %v990 = vpack.c.b16 %v694, %v690
    %v991 = vpack.c.b16 %v695, %v691
    %v992 = vpack.c.b16 %v696, %v692
    %v993 = vpack.c.b16 %v697, %v693
    %v994 = vpack.c.b16 %v702, %v698
    %v995 = vpack.c.b16 %v703, %v699
    %v996 = vpack.c.b16 %v704, %v700
    %v997 = vpack.c.b16 %v705, %v701
    %v998 = vpack.c.b16 %v710, %v706
    %v999 = vpack.c.b16 %v711, %v707
    %v1000 = vpack.c.b16 %v712, %v708
    %v1001 = vpack.c.b16 %v713, %v709
    %v1002 = vpack.c.b16 %v718, %v714
    %v1003 = vpack.c.b16 %v719, %v715
    %v1004 = vpack.c.b16 %v720, %v716
    %v1005 = vpack.c.b16 %v721, %v717
    %v1006 = vpack.c.b16 %v726, %v722
    %v1007 = vpack.c.b16 %v727, %v723
    %v1008 = vpack.c.b16 %v728, %v724
    %v1009 = vpack.c.b16 %v729, %v725
    %v1010 = vpack.c.b16 %v734, %v730
    %v1011 = vpack.c.b16 %v735, %v731
    %v1012 = vpack.c.b16 %v736, %v732
    %v1013 = vpack.c.b16 %v737, %v733
    %v1014 = vpack.c.b16 %v742, %v738
    %v1015 = vpack.c.b16 %v743, %v739
    %v1016 = vpack.c.b16 %v744, %v740
    %v1017 = vpack.c.b16 %v745, %v741
    %v1018 = vpack.c.b16 %v750, %v746
    %v1019 = vpack.c.b16 %v751, %v747
    %v1020 = vpack.c.b16 %v752, %v748
    %v1021 = vpack.c.b16 %v753, %v749
    %v1022 = vpack.c.b16 %v758, %v754
    %v1023 = vpack.c.b16 %v759, %v755
    %v1024 = vpack.c.b16 %v760, %v756
    %v1025 = vpack.c.b16 %v761, %v757
    %v1026 = vpack.c.b16 %v766, %v762
    %v1027 = vpack.c.b16 %v767, %v763
    %v1028 = vpack.c.b16 %v768, %v764
    %v1029 = vpack.c.b16 %v769, %v765
    %v1030 = vpack.c.b16 %v774, %v770
    %v1031 = vpack.c.b16 %v775, %v771
    %v1032 = vpack.c.b16 %v776, %v772
    %v1033 = vpack.c.b16 %v777, %v773
    %v1034 = vpack.c.b16 %v782, %v778
    %v1035 = vpack.c.b16 %v783, %v779
    %v1036 = vpack.c.b16 %v784, %v780
    %v1037 = vpack.c.b16 %v785, %v781
    %v1038 = vpack.c.b16 %v790, %v786
    %v1039 = vpack.c.b16 %v791, %v787
    %v1040 = vpack.c.b16 %v792, %v788
    %v1041 = vpack.c.b16 %v793, %v789
    %v1042 = vpack.c.b16 %v798, %v794
    %v1043 = vpack.c.b16 %v799, %v795
    %v1044 = vpack.c.b16 %v800, %v796
    %v1045 = vpack.c.b16 %v801, %v797
    %v1046 = vpack.c.b16 %v806, %v802
    %v1047 = vpack.c.b16 %v807, %v803
    %v1048 = vpack.c.b16 %v808, %v804
    %v1049 = vpack.c.b16 %v809, %v805
    %v1050 = vpack.c.b16 %v814, %v810
    %v1051 = vpack.c.b16 %v815, %v811
    %v1052 = vpack.c.b16 %v816, %v812
    %v1053 = vpack.c.b16 %v817, %v813
    %v1054 = vpack.c.b16 %v822, %v818
    %v1055 = vpack.c.b16 %v823, %v819
    %v1056 = vpack.c.b16 %v824, %v820
    %v1057 = vpack.c.b16 %v825, %v821
    %v1058 = vpack.c.b16 %v830, %v826
    %v1059 = vpack.c.b16 %v831, %v827
    %v1060 = vpack.c.b16 %v832, %v828
    %v1061 = vpack.c.b16 %v833, %v829
    %v1062 = vpack.c.b16 %v838, %v834
    %v1063 = vpack.c.b16 %v839, %v835
    %v1064 = vpack.c.b16 %v840, %v836
    %v1065 = vpack.c.b16 %v841, %v837
    %v1066 = vpack.c.b16 %v846, %v842
    %v1067 = vpack.c.b16 %v847, %v843
    %v1068 = vpack.c.b16 %v848, %v844
    %v1069 = vpack.c.b16 %v849, %v845
    %v1070 = vpack.c.b16 %v854, %v850
    %v1071 = vpack.c.b16 %v855, %v851
    %v1072 = vpack.c.b16 %v856, %v852
    %v1073 = vpack.c.b16 %v857, %v853
    %v1074 = vpack.c.b16 %v862, %v858
    %v1075 = vpack.c.b16 %v863, %v859
    %v1076 = vpack.c.b16 %v864, %v860
    %v1077 = vpack.c.b16 %v865, %v861
    %v1078 = vpack.c.b16 %v870, %v866
    %v1079 = vpack.c.b16 %v871, %v867
    %v1080 = vpack.c.b16 %v872, %v868
    %v1081 = vpack.c.b16 %v873, %v869
    %v1082 = vpack.c.b16 %v878, %v874
    %v1083 = vpack.c.b16 %v879, %v875
    %v1084 = vpack.c.b16 %v880, %v876
    %v1085 = vpack.c.b16 %v881, %v877
    %v1086 = vpack.c.b16 %v886, %v882
    %v1087 = vpack.c.b16 %v887, %v883
    %v1088 = vpack.c.b16 %v888, %v884
    %v1089 = vpack.c.b16 %v889, %v885
    %v1090 = vpack.c.b16 %v894, %v890
    %v1091 = vpack.c.b16 %v895, %v891
    %v1092 = vpack.c.b16 %v896, %v892
    %v1093 = vpack.c.b16 %v897, %v893
    %vm1290 = vcmask 130048
    %v1292 = vsel %vm1290, %v303, 0
    %1294 = vmatpush.bf16.msra.mxu0 %v926
    %1295 = vmatpush.bf16.msra.mxu0 %v922
    %1296 = vmatpush.bf16.msra.mxu0 %v918
    %1297 = vmatpush.bf16.msra.mxu0 %v914
    %1298 = vmatpush.bf16.msra.mxu0 %v910
    %1299 = vmatpush.bf16.msra.mxu0 %v906
    %1300 = vmatpush.bf16.msra.mxu0 %v902
    %1301 = vmatpush.bf16.msra.mxu0 %v898
    %1302 = vmatmul.bf16.gmra.mxu0 %v297
    %v1303 = vpop.f32.mrf.mxu0
    %v1304 = vadd.f32 %v267, %v1303
    %v1305 = vpop.f32.mrf.mxu0
    %v1306 = vadd.f32 %v267, %v1305
    %1307 = vdwg.mxu0
    %1308 = vmatpush.bf16.msra.mxu0 %v958
    %1309 = vmatpush.bf16.msra.mxu0 %v954
    %1310 = vmatpush.bf16.msra.mxu0 %v950
    %1311 = vmatpush.bf16.msra.mxu0 %v946
    %1312 = vmatpush.bf16.msra.mxu0 %v942
    %1313 = vmatpush.bf16.msra.mxu0 %v938
    %1314 = vmatpush.bf16.msra.mxu0 %v934
    %1315 = vmatpush.bf16.msra.mxu0 %v930
    %1316 = vmatmul.bf16.gmra.mxu0 %v298
    %v1317 = vpop.f32.mrf.mxu0
    %v1318 = vadd.f32 %v1304, %v1317
    %v1319 = vpop.f32.mrf.mxu0
    %v1320 = vadd.f32 %v1306, %v1319
    %1321 = vdwg.mxu0
    %1322 = vmatpush.bf16.msra.mxu0 %v990
    %1323 = vmatpush.bf16.msra.mxu0 %v986
    %1324 = vmatpush.bf16.msra.mxu0 %v982
    %1325 = vmatpush.bf16.msra.mxu0 %v978
    %1326 = vmatpush.bf16.msra.mxu0 %v974
    %1327 = vmatpush.bf16.msra.mxu0 %v970
    %1328 = vmatpush.bf16.msra.mxu0 %v966
    %1329 = vmatpush.bf16.msra.mxu0 %v962
    %1330 = vmatmul.bf16.gmra.mxu0 %v299
    %v1331 = vpop.f32.mrf.mxu0
    %v1332 = vadd.f32 %v1318, %v1331
    %v1333 = vpop.f32.mrf.mxu0
    %v1334 = vadd.f32 %v1320, %v1333
    %1335 = vdwg.mxu0
    %1336 = vmatpush.bf16.msra.mxu0 %v1022
    %1337 = vmatpush.bf16.msra.mxu0 %v1018
    %1338 = vmatpush.bf16.msra.mxu0 %v1014
    %1339 = vmatpush.bf16.msra.mxu0 %v1010
    %1340 = vmatpush.bf16.msra.mxu0 %v1006
    %1341 = vmatpush.bf16.msra.mxu0 %v1002
    %1342 = vmatpush.bf16.msra.mxu0 %v998
    %1343 = vmatpush.bf16.msra.mxu0 %v994
    %1344 = vmatmul.bf16.gmra.mxu0 %v300
    %v1345 = vpop.f32.mrf.mxu0
    %v1346 = vadd.f32 %v1332, %v1345
    %v1347 = vpop.f32.mrf.mxu0
    %v1348 = vadd.f32 %v1334, %v1347
    %1349 = vdwg.mxu0
    %1350 = vmatpush.bf16.msra.mxu0 %v1054
    %1351 = vmatpush.bf16.msra.mxu0 %v1050
    %1352 = vmatpush.bf16.msra.mxu0 %v1046
    %1353 = vmatpush.bf16.msra.mxu0 %v1042
    %1354 = vmatpush.bf16.msra.mxu0 %v1038
    %1355 = vmatpush.bf16.msra.mxu0 %v1034
    %1356 = vmatpush.bf16.msra.mxu0 %v1030
    %1357 = vmatpush.bf16.msra.mxu0 %v1026
    %1358 = vmatmul.bf16.gmra.mxu0 %v301
    %v1359 = vpop.f32.mrf.mxu0
    %v1360 = vadd.f32 %v1346, %v1359
    %v1361 = vpop.f32.mrf.mxu0
    %v1362 = vadd.f32 %v1348, %v1361
    %1363 = vdwg.mxu0
    %1364 = vmatpush.bf16.msra.mxu0 %v1086
    %1365 = vmatpush.bf16.msra.mxu0 %v1082
    %1366 = vmatpush.bf16.msra.mxu0 %v1078
    %1367 = vmatpush.bf16.msra.mxu0 %v1074
    %1368 = vmatpush.bf16.msra.mxu0 %v1070
    %1369 = vmatpush.bf16.msra.mxu0 %v1066
    %1370 = vmatpush.bf16.msra.mxu0 %v1062
    %1371 = vmatpush.bf16.msra.mxu0 %v1058
    %1372 = vmatmul.bf16.gmra.mxu0 %v302
    %v1373 = vpop.f32.mrf.mxu0
    %v1374 = vadd.f32 %v1360, %v1373
    %v1375 = vpop.f32.mrf.mxu0
    %v1376 = vadd.f32 %v1362, %v1375
    %1377 = vdwg.mxu0
    %1378 = vmatpush.bf16.msra.mxu0 0
    %1379 = vmatpush.bf16.msra.mxu0 0
    %1380 = vmatpush.bf16.msra.mxu0 0
    %1381 = vmatpush.bf16.msra.mxu0 0
    %1382 = vmatpush.bf16.msra.mxu0 0
    %1383 = vmatpush.bf16.msra.mxu0 0
    %1384 = vmatpush.bf16.msra.mxu0 0
    %1385 = vmatpush.bf16.msra.mxu0 %v1090
    %1386 = vmatmul.bf16.gmra.mxu0 %v1292
    %v1387 = vpop.f32.mrf.mxu0
    %v1388 = vadd.f32 %v1374, %v1387
    %v1389 = vpop.f32.mrf.mxu0
    %v1390 = vadd.f32 %v1376, %v1389
    %1391 = vdwg.mxu0
    %1392 = vmatpush.bf16.msra.mxu0 %v927
    %1393 = vmatpush.bf16.msra.mxu0 %v923
    %1394 = vmatpush.bf16.msra.mxu0 %v919
    %1395 = vmatpush.bf16.msra.mxu0 %v915
    %1396 = vmatpush.bf16.msra.mxu0 %v911
    %1397 = vmatpush.bf16.msra.mxu0 %v907
    %1398 = vmatpush.bf16.msra.mxu0 %v903
    %1399 = vmatpush.bf16.msra.mxu0 %v899
    %1400 = vmatmul.bf16.gmra.mxu0 %v297
    %v1401 = vpop.f32.mrf.mxu0
    %v1402 = vadd.f32 %v268, %v1401
    %v1403 = vpop.f32.mrf.mxu0
    %v1404 = vadd.f32 %v268, %v1403
    %1405 = vdwg.mxu0
    %1406 = vmatpush.bf16.msra.mxu0 %v959
    %1407 = vmatpush.bf16.msra.mxu0 %v955
    %1408 = vmatpush.bf16.msra.mxu0 %v951
    %1409 = vmatpush.bf16.msra.mxu0 %v947
    %1410 = vmatpush.bf16.msra.mxu0 %v943
    %1411 = vmatpush.bf16.msra.mxu0 %v939
    %1412 = vmatpush.bf16.msra.mxu0 %v935
    %1413 = vmatpush.bf16.msra.mxu0 %v931
    %1414 = vmatmul.bf16.gmra.mxu0 %v298
    %v1415 = vpop.f32.mrf.mxu0
    %v1416 = vadd.f32 %v1402, %v1415
    %v1417 = vpop.f32.mrf.mxu0
    %v1418 = vadd.f32 %v1404, %v1417
    %1419 = vdwg.mxu0
    %1420 = vmatpush.bf16.msra.mxu0 %v991
    %1421 = vmatpush.bf16.msra.mxu0 %v987
    %1422 = vmatpush.bf16.msra.mxu0 %v983
    %1423 = vmatpush.bf16.msra.mxu0 %v979
    %1424 = vmatpush.bf16.msra.mxu0 %v975
    %1425 = vmatpush.bf16.msra.mxu0 %v971
    %1426 = vmatpush.bf16.msra.mxu0 %v967
    %1427 = vmatpush.bf16.msra.mxu0 %v963
    %1428 = vmatmul.bf16.gmra.mxu0 %v299
    %v1429 = vpop.f32.mrf.mxu0
    %v1430 = vadd.f32 %v1416, %v1429
    %v1431 = vpop.f32.mrf.mxu0
    %v1432 = vadd.f32 %v1418, %v1431
    %1433 = vdwg.mxu0
    %1434 = vmatpush.bf16.msra.mxu0 %v1023
    %1435 = vmatpush.bf16.msra.mxu0 %v1019
    %1436 = vmatpush.bf16.msra.mxu0 %v1015
    %1437 = vmatpush.bf16.msra.mxu0 %v1011
    %1438 = vmatpush.bf16.msra.mxu0 %v1007
    %1439 = vmatpush.bf16.msra.mxu0 %v1003
    %1440 = vmatpush.bf16.msra.mxu0 %v999
    %1441 = vmatpush.bf16.msra.mxu0 %v995
    %1442 = vmatmul.bf16.gmra.mxu0 %v300
    %v1443 = vpop.f32.mrf.mxu0
    %v1444 = vadd.f32 %v1430, %v1443
    %v1445 = vpop.f32.mrf.mxu0
    %v1446 = vadd.f32 %v1432, %v1445
    %1447 = vdwg.mxu0
    %1448 = vmatpush.bf16.msra.mxu0 %v1055
    %1449 = vmatpush.bf16.msra.mxu0 %v1051
    %1450 = vmatpush.bf16.msra.mxu0 %v1047
    %1451 = vmatpush.bf16.msra.mxu0 %v1043
    %1452 = vmatpush.bf16.msra.mxu0 %v1039
    %1453 = vmatpush.bf16.msra.mxu0 %v1035
    %1454 = vmatpush.bf16.msra.mxu0 %v1031
    %1455 = vmatpush.bf16.msra.mxu0 %v1027
    %1456 = vmatmul.bf16.gmra.mxu0 %v301
    %v1457 = vpop.f32.mrf.mxu0
    %v1458 = vadd.f32 %v1444, %v1457
    %v1459 = vpop.f32.mrf.mxu0
    %v1460 = vadd.f32 %v1446, %v1459
    %1461 = vdwg.mxu0
    %1462 = vmatpush.bf16.msra.mxu0 %v1087
    %1463 = vmatpush.bf16.msra.mxu0 %v1083
    %1464 = vmatpush.bf16.msra.mxu0 %v1079
    %1465 = vmatpush.bf16.msra.mxu0 %v1075
    %1466 = vmatpush.bf16.msra.mxu0 %v1071
    %1467 = vmatpush.bf16.msra.mxu0 %v1067
    %1468 = vmatpush.bf16.msra.mxu0 %v1063
    %1469 = vmatpush.bf16.msra.mxu0 %v1059
    %1470 = vmatmul.bf16.gmra.mxu0 %v302
    %v1471 = vpop.f32.mrf.mxu0
    %v1472 = vadd.f32 %v1458, %v1471
    %v1473 = vpop.f32.mrf.mxu0
    %v1474 = vadd.f32 %v1460, %v1473
    %1475 = vdwg.mxu0
    %1476 = vmatpush.bf16.msra.mxu0 0
    %1477 = vmatpush.bf16.msra.mxu0 0
    %1478 = vmatpush.bf16.msra.mxu0 0
    %1479 = vmatpush.bf16.msra.mxu0 0
    %1480 = vmatpush.bf16.msra.mxu0 0
    %1481 = vmatpush.bf16.msra.mxu0 0
    %1482 = vmatpush.bf16.msra.mxu0 0
    %1483 = vmatpush.bf16.msra.mxu0 %v1091
    %1484 = vmatmul.bf16.gmra.mxu0 %v1292
    %v1485 = vpop.f32.mrf.mxu0
    %v1486 = vadd.f32 %v1472, %v1485
    %v1487 = vpop.f32.mrf.mxu0
    %v1488 = vadd.f32 %v1474, %v1487
    %1489 = vdwg.mxu0
    %1490 = vmatpush.bf16.msra.mxu0 %v928
    %1491 = vmatpush.bf16.msra.mxu0 %v924
    %1492 = vmatpush.bf16.msra.mxu0 %v920
    %1493 = vmatpush.bf16.msra.mxu0 %v916
    %1494 = vmatpush.bf16.msra.mxu0 %v912
    %1495 = vmatpush.bf16.msra.mxu0 %v908
    %1496 = vmatpush.bf16.msra.mxu0 %v904
    %1497 = vmatpush.bf16.msra.mxu0 %v900
    %1498 = vmatmul.bf16.gmra.mxu0 %v297
    %v1499 = vpop.f32.mrf.mxu0
    %v1500 = vadd.f32 %v269, %v1499
    %v1501 = vpop.f32.mrf.mxu0
    %v1502 = vadd.f32 %v269, %v1501
    %1503 = vdwg.mxu0
    %1504 = vmatpush.bf16.msra.mxu0 %v960
    %1505 = vmatpush.bf16.msra.mxu0 %v956
    %1506 = vmatpush.bf16.msra.mxu0 %v952
    %1507 = vmatpush.bf16.msra.mxu0 %v948
    %1508 = vmatpush.bf16.msra.mxu0 %v944
    %1509 = vmatpush.bf16.msra.mxu0 %v940
    %1510 = vmatpush.bf16.msra.mxu0 %v936
    %1511 = vmatpush.bf16.msra.mxu0 %v932
    %1512 = vmatmul.bf16.gmra.mxu0 %v298
    %v1513 = vpop.f32.mrf.mxu0
    %v1514 = vadd.f32 %v1500, %v1513
    %v1515 = vpop.f32.mrf.mxu0
    %v1516 = vadd.f32 %v1502, %v1515
    %1517 = vdwg.mxu0
    %1518 = vmatpush.bf16.msra.mxu0 %v992
    %1519 = vmatpush.bf16.msra.mxu0 %v988
    %1520 = vmatpush.bf16.msra.mxu0 %v984
    %1521 = vmatpush.bf16.msra.mxu0 %v980
    %1522 = vmatpush.bf16.msra.mxu0 %v976
    %1523 = vmatpush.bf16.msra.mxu0 %v972
    %1524 = vmatpush.bf16.msra.mxu0 %v968
    %1525 = vmatpush.bf16.msra.mxu0 %v964
    %1526 = vmatmul.bf16.gmra.mxu0 %v299
    %v1527 = vpop.f32.mrf.mxu0
    %v1528 = vadd.f32 %v1514, %v1527
    %v1529 = vpop.f32.mrf.mxu0
    %v1530 = vadd.f32 %v1516, %v1529
    %1531 = vdwg.mxu0
    %1532 = vmatpush.bf16.msra.mxu0 %v1024
    %1533 = vmatpush.bf16.msra.mxu0 %v1020
    %1534 = vmatpush.bf16.msra.mxu0 %v1016
    %1535 = vmatpush.bf16.msra.mxu0 %v1012
    %1536 = vmatpush.bf16.msra.mxu0 %v1008
    %1537 = vmatpush.bf16.msra.mxu0 %v1004
    %1538 = vmatpush.bf16.msra.mxu0 %v1000
    %1539 = vmatpush.bf16.msra.mxu0 %v996
    %1540 = vmatmul.bf16.gmra.mxu0 %v300
    %v1541 = vpop.f32.mrf.mxu0
    %v1542 = vadd.f32 %v1528, %v1541
    %v1543 = vpop.f32.mrf.mxu0
    %v1544 = vadd.f32 %v1530, %v1543
    %1545 = vdwg.mxu0
    %1546 = vmatpush.bf16.msra.mxu0 %v1056
    %1547 = vmatpush.bf16.msra.mxu0 %v1052
    %1548 = vmatpush.bf16.msra.mxu0 %v1048
    %1549 = vmatpush.bf16.msra.mxu0 %v1044
    %1550 = vmatpush.bf16.msra.mxu0 %v1040
    %1551 = vmatpush.bf16.msra.mxu0 %v1036
    %1552 = vmatpush.bf16.msra.mxu0 %v1032
    %1553 = vmatpush.bf16.msra.mxu0 %v1028
    %1554 = vmatmul.bf16.gmra.mxu0 %v301
    %v1555 = vpop.f32.mrf.mxu0
    %v1556 = vadd.f32 %v1542, %v1555
    %v1557 = vpop.f32.mrf.mxu0
    %v1558 = vadd.f32 %v1544, %v1557
    %1559 = vdwg.mxu0
    %1560 = vmatpush.bf16.msra.mxu0 %v1088
    %1561 = vmatpush.bf16.msra.mxu0 %v1084
    %1562 = vmatpush.bf16.msra.mxu0 %v1080
    %1563 = vmatpush.bf16.msra.mxu0 %v1076
    %1564 = vmatpush.bf16.msra.mxu0 %v1072
    %1565 = vmatpush.bf16.msra.mxu0 %v1068
    %1566 = vmatpush.bf16.msra.mxu0 %v1064
    %1567 = vmatpush.bf16.msra.mxu0 %v1060
    %1568 = vmatmul.bf16.gmra.mxu0 %v302
    %v1569 = vpop.f32.mrf.mxu0
    %v1570 = vadd.f32 %v1556, %v1569
    %v1571 = vpop.f32.mrf.mxu0
    %v1572 = vadd.f32 %v1558, %v1571
    %1573 = vdwg.mxu0
    %1574 = vmatpush.bf16.msra.mxu0 0
    %1575 = vmatpush.bf16.msra.mxu0 0
    %1576 = vmatpush.bf16.msra.mxu0 0
    %1577 = vmatpush.bf16.msra.mxu0 0
    %1578 = vmatpush.bf16.msra.mxu0 0
    %1579 = vmatpush.bf16.msra.mxu0 0
    %1580 = vmatpush.bf16.msra.mxu0 0
    %1581 = vmatpush.bf16.msra.mxu0 %v1092
    %1582 = vmatmul.bf16.gmra.mxu0 %v1292
    %v1583 = vpop.f32.mrf.mxu0
    %v1584 = vadd.f32 %v1570, %v1583
    %v1585 = vpop.f32.mrf.mxu0
    %v1586 = vadd.f32 %v1572, %v1585
    %1587 = vdwg.mxu0
    %1588 = vmatpush.bf16.msra.mxu0 %v929
    %1589 = vmatpush.bf16.msra.mxu0 %v925
    %1590 = vmatpush.bf16.msra.mxu0 %v921
    %1591 = vmatpush.bf16.msra.mxu0 %v917
    %1592 = vmatpush.bf16.msra.mxu0 %v913
    %1593 = vmatpush.bf16.msra.mxu0 %v909
    %1594 = vmatpush.bf16.msra.mxu0 %v905
    %1595 = vmatpush.bf16.msra.mxu0 %v901
    %1596 = vmatmul.bf16.gmra.mxu0 %v297
    %v1597 = vpop.f32.mrf.mxu0
    %v1598 = vadd.f32 %v270, %v1597
    %v1599 = vpop.f32.mrf.mxu0
    %v1600 = vadd.f32 %v270, %v1599
    %1601 = vdwg.mxu0
    %1602 = vmatpush.bf16.msra.mxu0 %v961
    %1603 = vmatpush.bf16.msra.mxu0 %v957
    %1604 = vmatpush.bf16.msra.mxu0 %v953
    %1605 = vmatpush.bf16.msra.mxu0 %v949
    %1606 = vmatpush.bf16.msra.mxu0 %v945
    %1607 = vmatpush.bf16.msra.mxu0 %v941
    %1608 = vmatpush.bf16.msra.mxu0 %v937
    %1609 = vmatpush.bf16.msra.mxu0 %v933
    %1610 = vmatmul.bf16.gmra.mxu0 %v298
    %v1611 = vpop.f32.mrf.mxu0
    %v1612 = vadd.f32 %v1598, %v1611
    %v1613 = vpop.f32.mrf.mxu0
    %v1614 = vadd.f32 %v1600, %v1613
    %1615 = vdwg.mxu0
    %1616 = vmatpush.bf16.msra.mxu0 %v993
    %1617 = vmatpush.bf16.msra.mxu0 %v989
    %1618 = vmatpush.bf16.msra.mxu0 %v985
    %1619 = vmatpush.bf16.msra.mxu0 %v981
    %1620 = vmatpush.bf16.msra.mxu0 %v977
    %1621 = vmatpush.bf16.msra.mxu0 %v973
    %1622 = vmatpush.bf16.msra.mxu0 %v969
    %1623 = vmatpush.bf16.msra.mxu0 %v965
    %1624 = vmatmul.bf16.gmra.mxu0 %v299
    %v1625 = vpop.f32.mrf.mxu0
    %v1626 = vadd.f32 %v1612, %v1625
    %v1627 = vpop.f32.mrf.mxu0
    %v1628 = vadd.f32 %v1614, %v1627
    %1629 = vdwg.mxu0
    %1630 = vmatpush.bf16.msra.mxu0 %v1025
    %1631 = vmatpush.bf16.msra.mxu0 %v1021
    %1632 = vmatpush.bf16.msra.mxu0 %v1017
    %1633 = vmatpush.bf16.msra.mxu0 %v1013
    %1634 = vmatpush.bf16.msra.mxu0 %v1009
    %1635 = vmatpush.bf16.msra.mxu0 %v1005
    %1636 = vmatpush.bf16.msra.mxu0 %v1001
    %1637 = vmatpush.bf16.msra.mxu0 %v997
    %1638 = vmatmul.bf16.gmra.mxu0 %v300
    %v1639 = vpop.f32.mrf.mxu0
    %v1640 = vadd.f32 %v1626, %v1639
    %v1641 = vpop.f32.mrf.mxu0
    %v1642 = vadd.f32 %v1628, %v1641
    %1643 = vdwg.mxu0
    %1644 = vmatpush.bf16.msra.mxu0 %v1057
    %1645 = vmatpush.bf16.msra.mxu0 %v1053
    %1646 = vmatpush.bf16.msra.mxu0 %v1049
    %1647 = vmatpush.bf16.msra.mxu0 %v1045
    %1648 = vmatpush.bf16.msra.mxu0 %v1041
    %1649 = vmatpush.bf16.msra.mxu0 %v1037
    %1650 = vmatpush.bf16.msra.mxu0 %v1033
    %1651 = vmatpush.bf16.msra.mxu0 %v1029
    %1652 = vmatmul.bf16.gmra.mxu0 %v301
    %v1653 = vpop.f32.mrf.mxu0
    %v1654 = vadd.f32 %v1640, %v1653
    %v1655 = vpop.f32.mrf.mxu0
    %v1656 = vadd.f32 %v1642, %v1655
    %1657 = vdwg.mxu0
    %1658 = vmatpush.bf16.msra.mxu0 %v1089
    %1659 = vmatpush.bf16.msra.mxu0 %v1085
    %1660 = vmatpush.bf16.msra.mxu0 %v1081
    %1661 = vmatpush.bf16.msra.mxu0 %v1077
    %1662 = vmatpush.bf16.msra.mxu0 %v1073
    %1663 = vmatpush.bf16.msra.mxu0 %v1069
    %1664 = vmatpush.bf16.msra.mxu0 %v1065
    %1665 = vmatpush.bf16.msra.mxu0 %v1061
    %1666 = vmatmul.bf16.gmra.mxu0 %v302
    %v1667 = vpop.f32.mrf.mxu0
    %v1668 = vadd.f32 %v1654, %v1667
    %v1669 = vpop.f32.mrf.mxu0
    %v1670 = vadd.f32 %v1656, %v1669
    %1671 = vdwg.mxu0
    %1672 = vmatpush.bf16.msra.mxu0 0
    %1673 = vmatpush.bf16.msra.mxu0 0
    %1674 = vmatpush.bf16.msra.mxu0 0
    %1675 = vmatpush.bf16.msra.mxu0 0
    %1676 = vmatpush.bf16.msra.mxu0 0
    %1677 = vmatpush.bf16.msra.mxu0 0
    %1678 = vmatpush.bf16.msra.mxu0 0
    %1679 = vmatpush.bf16.msra.mxu0 %v1093
    %1680 = vmatmul.bf16.gmra.mxu0 %v1292
    %v1681 = vpop.f32.mrf.mxu0
    %v1682 = vadd.f32 %v1668, %v1681
    %v1683 = vpop.f32.mrf.mxu0
    %v1684 = vadd.f32 %v1670, %v1683
    %1685 = vdwg.mxu0
    %v1686 = vmax.f32 %v1388, 0.0
    %v1687 = vmax.f32 %v1486, 0.0
    %v1688 = vmax.f32 %v1584, 0.0
    %v1689 = vmax.f32 %v1682, 0.0
    %v1690 = vmax.f32 %v1390, 0.0
    %v1691 = vmax.f32 %v1488, 0.0
    %v1692 = vmax.f32 %v1586, 0.0
    %v1693 = vmax.f32 %v1684, 0.0
    %v1694 = vpack.c.bf16 %v1690, %v1686
    %v1695 = vpack.c.bf16 %v1691, %v1687
    %v1696 = vpack.c.bf16 %v1692, %v1688
    %v1697 = vpack.c.bf16 %v1693, %v1689
    %v1698 = vld [vmem:[%s3] sm:$0xff]
    %v1699 = vld [vmem:[%s3 + $0x8] sm:$0xff]
    %v1700 = vld [vmem:[%s3 + $0x10] sm:$0xff]
    %v1701 = vld [vmem:[%s3 + $0x18] sm:$0xff]
    %v1702 = vld [vmem:[%s3 + $0x20] sm:$0xff]
    %v1703 = vld [vmem:[%s3 + $0x28] sm:$0xff]
    %v1704 = vld [vmem:[%s3 + $0x30] sm:$0xff]
    %v1705 = vld [vmem:[%s3 + $0x38] sm:$0xff]
    %v1706 = vld [vmem:[%s3 + $0x40] sm:$0xff]
    %v1707 = vld [vmem:[%s3 + $0x48] sm:$0xff]
    %v1708 = vld [vmem:[%s3 + $0x50] sm:$0xff]
    %v1709 = vld [vmem:[%s3 + $0x58] sm:$0xff]
    %v1710 = vld [vmem:[%s3 + $0x60] sm:$0xff]
    %v1711 = vld [vmem:[%s3 + $0x68] sm:$0xff]
    %v1712 = vld [vmem:[%s3 + $0x70] sm:$0xff]
    %v1713 = vld [vmem:[%s3 + $0x78] sm:$0xff]
    %v1714 = vld [vmem:[%s3 + $0x80] sm:$0xff]
    %v1715 = vld [vmem:[%s3 + $0x88] sm:$0xff]
    %v1716 = vld [vmem:[%s3 + $0x90] sm:$0xff]
    %v1717 = vld [vmem:[%s3 + $0x98] sm:$0xff]
    %v1718 = vld [vmem:[%s3 + $0xa0] sm:$0xff]
    %v1719 = vld [vmem:[%s3 + $0xa8] sm:$0xff]
    %v1720 = vld [vmem:[%s3 + $0xb0] sm:$0xff]
    %v1721 = vld [vmem:[%s3 + $0xb8] sm:$0xff]
    %v1722 = vld [vmem:[%s3 + $0xc0] sm:$0xff]
    %v1723 = vld [vmem:[%s3 + $0xc8] sm:$0xff]
    %v1724 = vld [vmem:[%s3 + $0xd0] sm:$0xff]
    %v1725 = vld [vmem:[%s3 + $0xd8] sm:$0xff]
    %v1726 = vld [vmem:[%s3 + $0xe0] sm:$0xff]
    %v1727 = vld [vmem:[%s3 + $0xe8] sm:$0xff]
    %v1728 = vld [vmem:[%s3 + $0xf0] sm:$0xff]
    %v1729 = vld [vmem:[%s3 + $0xf8] sm:$0xff]
    %v1730 = vld [vmem:[%s3 + $0x100] sm:$0xff]
    %v1731 = vld [vmem:[%s3 + $0x108] sm:$0xff]
    %v1732 = vld [vmem:[%s3 + $0x110] sm:$0xff]
    %v1733 = vld [vmem:[%s3 + $0x118] sm:$0xff]
    %v1734 = vld [vmem:[%s3 + $0x120] sm:$0xff]
    %v1735 = vld [vmem:[%s3 + $0x128] sm:$0xff]
    %v1736 = vld [vmem:[%s3 + $0x130] sm:$0xff]
    %v1737 = vld [vmem:[%s3 + $0x138] sm:$0xff]
    %v1738 = vld [vmem:[%s3 + $0x140] sm:$0xff]
    %v1739 = vld [vmem:[%s3 + $0x148] sm:$0xff]
    %v1740 = vld [vmem:[%s3 + $0x150] sm:$0xff]
    %v1741 = vld [vmem:[%s3 + $0x158] sm:$0xff]
    %v1742 = vld [vmem:[%s3 + $0x160] sm:$0xff]
    %v1743 = vld [vmem:[%s3 + $0x168] sm:$0xff]
    %v1744 = vld [vmem:[%s3 + $0x170] sm:$0xff]
    %v1745 = vld [vmem:[%s3 + $0x178] sm:$0xff]
    %v1746 = vld [vmem:[%s3 + $0x180] sm:$0xff]
    %v1747 = vld [vmem:[%s3 + $0x188] sm:$0xff]
    %v1748 = vld [vmem:[%s3 + $0x190] sm:$0xff]
    %v1749 = vld [vmem:[%s3 + $0x198] sm:$0xff]
    %v1750 = vld [vmem:[%s3 + $0x1a0] sm:$0xff]
    %v1751 = vld [vmem:[%s3 + $0x1a8] sm:$0xff]
    %v1752 = vld [vmem:[%s3 + $0x1b0] sm:$0xff]
    %v1753 = vld [vmem:[%s3 + $0x1b8] sm:$0xff]
    %v1754 = vld [vmem:[%s3 + $0x1c0] sm:$0xff]
    %v1755 = vld [vmem:[%s3 + $0x1c8] sm:$0xff]
    %v1756 = vld [vmem:[%s3 + $0x1d0] sm:$0xff]
    %v1757 = vld [vmem:[%s3 + $0x1d8] sm:$0xff]
    %v1758 = vld [vmem:[%s3 + $0x1e0] sm:$0xff]
    %v1759 = vld [vmem:[%s3 + $0x1e8] sm:$0xff]
    %v1760 = vld [vmem:[%s3 + $0x1f0] sm:$0xff]
    %v1761 = vld [vmem:[%s3 + $0x1f8] sm:$0xff]
    %v1762 = vld [vmem:[%s4] sm:$0x3]
    %v1764 = vperm.slane %v1762, 0
    %v1765 = vperm.slane %v1762, 1
    %v1832 = vunpack.c.l.b16 %v1698
    %v1833 = vunpack.c.h.b16 %v1698
    %v1834 = vunpack.c.l.b16 %v1699
    %v1835 = vunpack.c.h.b16 %v1699
    %v1836 = vunpack.c.l.b16 %v1700
    %v1837 = vunpack.c.h.b16 %v1700
    %v1838 = vunpack.c.l.b16 %v1701
    %v1839 = vunpack.c.h.b16 %v1701
    %v1840 = vunpack.c.l.b16 %v1702
    %v1841 = vunpack.c.h.b16 %v1702
    %v1842 = vunpack.c.l.b16 %v1703
    %v1843 = vunpack.c.h.b16 %v1703
    %v1844 = vunpack.c.l.b16 %v1704
    %v1845 = vunpack.c.h.b16 %v1704
    %v1846 = vunpack.c.l.b16 %v1705
    %v1847 = vunpack.c.h.b16 %v1705
    %v1848 = vunpack.c.l.b16 %v1706
    %v1849 = vunpack.c.h.b16 %v1706
    %v1850 = vunpack.c.l.b16 %v1707
    %v1851 = vunpack.c.h.b16 %v1707
    %v1852 = vunpack.c.l.b16 %v1708
    %v1853 = vunpack.c.h.b16 %v1708
    %v1854 = vunpack.c.l.b16 %v1709
    %v1855 = vunpack.c.h.b16 %v1709
    %v1856 = vunpack.c.l.b16 %v1710
    %v1857 = vunpack.c.h.b16 %v1710
    %v1858 = vunpack.c.l.b16 %v1711
    %v1859 = vunpack.c.h.b16 %v1711
    %v1860 = vunpack.c.l.b16 %v1712
    %v1861 = vunpack.c.h.b16 %v1712
    %v1862 = vunpack.c.l.b16 %v1713
    %v1863 = vunpack.c.h.b16 %v1713
    %v1864 = vunpack.c.l.b16 %v1714
    %v1865 = vunpack.c.h.b16 %v1714
    %v1866 = vunpack.c.l.b16 %v1715
    %v1867 = vunpack.c.h.b16 %v1715
    %v1868 = vunpack.c.l.b16 %v1716
    %v1869 = vunpack.c.h.b16 %v1716
    %v1870 = vunpack.c.l.b16 %v1717
    %v1871 = vunpack.c.h.b16 %v1717
    %v1872 = vunpack.c.l.b16 %v1718
    %v1873 = vunpack.c.h.b16 %v1718
    %v1874 = vunpack.c.l.b16 %v1719
    %v1875 = vunpack.c.h.b16 %v1719
    %v1876 = vunpack.c.l.b16 %v1720
    %v1877 = vunpack.c.h.b16 %v1720
    %v1878 = vunpack.c.l.b16 %v1721
    %v1879 = vunpack.c.h.b16 %v1721
    %v1880 = vunpack.c.l.b16 %v1722
    %v1881 = vunpack.c.h.b16 %v1722
    %v1882 = vunpack.c.l.b16 %v1723
    %v1883 = vunpack.c.h.b16 %v1723
    %v1884 = vunpack.c.l.b16 %v1724
    %v1885 = vunpack.c.h.b16 %v1724
    %v1886 = vunpack.c.l.b16 %v1725
    %v1887 = vunpack.c.h.b16 %v1725
    %v1888 = vunpack.c.l.b16 %v1726
    %v1889 = vunpack.c.h.b16 %v1726
    %v1890 = vunpack.c.l.b16 %v1727
    %v1891 = vunpack.c.h.b16 %v1727
    %v1892 = vunpack.c.l.b16 %v1728
    %v1893 = vunpack.c.h.b16 %v1728
    %v1894 = vunpack.c.l.b16 %v1729
    %v1895 = vunpack.c.h.b16 %v1729
    %v1896 = vunpack.c.l.b16 %v1730
    %v1897 = vunpack.c.h.b16 %v1730
    %v1898 = vunpack.c.l.b16 %v1731
    %v1899 = vunpack.c.h.b16 %v1731
    %v1900 = vunpack.c.l.b16 %v1732
    %v1901 = vunpack.c.h.b16 %v1732
    %v1902 = vunpack.c.l.b16 %v1733
    %v1903 = vunpack.c.h.b16 %v1733
    %v1904 = vunpack.c.l.b16 %v1734
    %v1905 = vunpack.c.h.b16 %v1734
    %v1906 = vunpack.c.l.b16 %v1735
    %v1907 = vunpack.c.h.b16 %v1735
    %v1908 = vunpack.c.l.b16 %v1736
    %v1909 = vunpack.c.h.b16 %v1736
    %v1910 = vunpack.c.l.b16 %v1737
    %v1911 = vunpack.c.h.b16 %v1737
    %v1912 = vunpack.c.l.b16 %v1738
    %v1913 = vunpack.c.h.b16 %v1738
    %v1914 = vunpack.c.l.b16 %v1739
    %v1915 = vunpack.c.h.b16 %v1739
    %v1916 = vunpack.c.l.b16 %v1740
    %v1917 = vunpack.c.h.b16 %v1740
    %v1918 = vunpack.c.l.b16 %v1741
    %v1919 = vunpack.c.h.b16 %v1741
    %v1920 = vunpack.c.l.b16 %v1742
    %v1921 = vunpack.c.h.b16 %v1742
    %v1922 = vunpack.c.l.b16 %v1743
    %v1923 = vunpack.c.h.b16 %v1743
    %v1924 = vunpack.c.l.b16 %v1744
    %v1925 = vunpack.c.h.b16 %v1744
    %v1926 = vunpack.c.l.b16 %v1745
    %v1927 = vunpack.c.h.b16 %v1745
    %v1928 = vunpack.c.l.b16 %v1746
    %v1929 = vunpack.c.h.b16 %v1746
    %v1930 = vunpack.c.l.b16 %v1747
    %v1931 = vunpack.c.h.b16 %v1747
    %v1932 = vunpack.c.l.b16 %v1748
    %v1933 = vunpack.c.h.b16 %v1748
    %v1934 = vunpack.c.l.b16 %v1749
    %v1935 = vunpack.c.h.b16 %v1749
    %v1936 = vunpack.c.l.b16 %v1750
    %v1937 = vunpack.c.h.b16 %v1750
    %v1938 = vunpack.c.l.b16 %v1751
    %v1939 = vunpack.c.h.b16 %v1751
    %v1940 = vunpack.c.l.b16 %v1752
    %v1941 = vunpack.c.h.b16 %v1752
    %v1942 = vunpack.c.l.b16 %v1753
    %v1943 = vunpack.c.h.b16 %v1753
    %v1944 = vunpack.c.l.b16 %v1754
    %v1945 = vunpack.c.h.b16 %v1754
    %v1946 = vunpack.c.l.b16 %v1755
    %v1947 = vunpack.c.h.b16 %v1755
    %v1948 = vunpack.c.l.b16 %v1756
    %v1949 = vunpack.c.h.b16 %v1756
    %v1950 = vunpack.c.l.b16 %v1757
    %v1951 = vunpack.c.h.b16 %v1757
    %v1952 = vunpack.c.l.b16 %v1758
    %v1953 = vunpack.c.h.b16 %v1758
    %v1954 = vunpack.c.l.b16 %v1759
    %v1955 = vunpack.c.h.b16 %v1759
    %v1956 = vunpack.c.l.b16 %v1760
    %v1957 = vunpack.c.h.b16 %v1760
    %v1958 = vunpack.c.l.b16 %v1761
    %v1959 = vunpack.c.h.b16 %v1761
    %v1960 = vpack.c.b16 %v1834, %v1832
    %v1961 = vpack.c.b16 %v1835, %v1833
    %v1962 = vpack.c.b16 %v1838, %v1836
    %v1963 = vpack.c.b16 %v1839, %v1837
    %v1964 = vpack.c.b16 %v1842, %v1840
    %v1965 = vpack.c.b16 %v1843, %v1841
    %v1966 = vpack.c.b16 %v1846, %v1844
    %v1967 = vpack.c.b16 %v1847, %v1845
    %v1968 = vpack.c.b16 %v1850, %v1848
    %v1969 = vpack.c.b16 %v1851, %v1849
    %v1970 = vpack.c.b16 %v1854, %v1852
    %v1971 = vpack.c.b16 %v1855, %v1853
    %v1972 = vpack.c.b16 %v1858, %v1856
    %v1973 = vpack.c.b16 %v1859, %v1857
    %v1974 = vpack.c.b16 %v1862, %v1860
    %v1975 = vpack.c.b16 %v1863, %v1861
    %v1976 = vpack.c.b16 %v1866, %v1864
    %v1977 = vpack.c.b16 %v1867, %v1865
    %v1978 = vpack.c.b16 %v1870, %v1868
    %v1979 = vpack.c.b16 %v1871, %v1869
    %v1980 = vpack.c.b16 %v1874, %v1872
    %v1981 = vpack.c.b16 %v1875, %v1873
    %v1982 = vpack.c.b16 %v1878, %v1876
    %v1983 = vpack.c.b16 %v1879, %v1877
    %v1984 = vpack.c.b16 %v1882, %v1880
    %v1985 = vpack.c.b16 %v1883, %v1881
    %v1986 = vpack.c.b16 %v1886, %v1884
    %v1987 = vpack.c.b16 %v1887, %v1885
    %v1988 = vpack.c.b16 %v1890, %v1888
    %v1989 = vpack.c.b16 %v1891, %v1889
    %v1990 = vpack.c.b16 %v1894, %v1892
    %v1991 = vpack.c.b16 %v1895, %v1893
    %v1992 = vpack.c.b16 %v1898, %v1896
    %v1993 = vpack.c.b16 %v1899, %v1897
    %v1994 = vpack.c.b16 %v1902, %v1900
    %v1995 = vpack.c.b16 %v1903, %v1901
    %v1996 = vpack.c.b16 %v1906, %v1904
    %v1997 = vpack.c.b16 %v1907, %v1905
    %v1998 = vpack.c.b16 %v1910, %v1908
    %v1999 = vpack.c.b16 %v1911, %v1909
    %v2000 = vpack.c.b16 %v1914, %v1912
    %v2001 = vpack.c.b16 %v1915, %v1913
    %v2002 = vpack.c.b16 %v1918, %v1916
    %v2003 = vpack.c.b16 %v1919, %v1917
    %v2004 = vpack.c.b16 %v1922, %v1920
    %v2005 = vpack.c.b16 %v1923, %v1921
    %v2006 = vpack.c.b16 %v1926, %v1924
    %v2007 = vpack.c.b16 %v1927, %v1925
    %v2008 = vpack.c.b16 %v1930, %v1928
    %v2009 = vpack.c.b16 %v1931, %v1929
    %v2010 = vpack.c.b16 %v1934, %v1932
    %v2011 = vpack.c.b16 %v1935, %v1933
    %v2012 = vpack.c.b16 %v1938, %v1936
    %v2013 = vpack.c.b16 %v1939, %v1937
    %v2014 = vpack.c.b16 %v1942, %v1940
    %v2015 = vpack.c.b16 %v1943, %v1941
    %v2016 = vpack.c.b16 %v1946, %v1944
    %v2017 = vpack.c.b16 %v1947, %v1945
    %v2018 = vpack.c.b16 %v1950, %v1948
    %v2019 = vpack.c.b16 %v1951, %v1949
    %v2020 = vpack.c.b16 %v1954, %v1952
    %v2021 = vpack.c.b16 %v1955, %v1953
    %v2022 = vpack.c.b16 %v1958, %v1956
    %v2023 = vpack.c.b16 %v1959, %v1957
    %2088 = vmatpush.bf16.msra.mxu0 %v1974
    %2089 = vmatpush.bf16.msra.mxu0 %v1972
    %2090 = vmatpush.bf16.msra.mxu0 %v1970
    %2091 = vmatpush.bf16.msra.mxu0 %v1968
    %2092 = vmatpush.bf16.msra.mxu0 %v1966
    %2093 = vmatpush.bf16.msra.mxu0 %v1964
    %2094 = vmatpush.bf16.msra.mxu0 %v1962
    %2095 = vmatpush.bf16.msra.mxu0 %v1960
    %2096 = vmatmul.bf16.gmra.mxu0 %v1694
    %v2097 = vpop.f32.mrf.mxu0
    %v2098 = vadd.f32 %v1764, %v2097
    %v2099 = vpop.f32.mrf.mxu0
    %v2100 = vadd.f32 %v1764, %v2099
    %2101 = vdwg.mxu0
    %2102 = vmatpush.bf16.msra.mxu0 %v1990
    %2103 = vmatpush.bf16.msra.mxu0 %v1988
    %2104 = vmatpush.bf16.msra.mxu0 %v1986
    %2105 = vmatpush.bf16.msra.mxu0 %v1984
    %2106 = vmatpush.bf16.msra.mxu0 %v1982
    %2107 = vmatpush.bf16.msra.mxu0 %v1980
    %2108 = vmatpush.bf16.msra.mxu0 %v1978
    %2109 = vmatpush.bf16.msra.mxu0 %v1976
    %2110 = vmatmul.bf16.gmra.mxu0 %v1695
    %v2111 = vpop.f32.mrf.mxu0
    %v2112 = vadd.f32 %v2098, %v2111
    %v2113 = vpop.f32.mrf.mxu0
    %v2114 = vadd.f32 %v2100, %v2113
    %2115 = vdwg.mxu0
    %2116 = vmatpush.bf16.msra.mxu0 %v2006
    %2117 = vmatpush.bf16.msra.mxu0 %v2004
    %2118 = vmatpush.bf16.msra.mxu0 %v2002
    %2119 = vmatpush.bf16.msra.mxu0 %v2000
    %2120 = vmatpush.bf16.msra.mxu0 %v1998
    %2121 = vmatpush.bf16.msra.mxu0 %v1996
    %2122 = vmatpush.bf16.msra.mxu0 %v1994
    %2123 = vmatpush.bf16.msra.mxu0 %v1992
    %2124 = vmatmul.bf16.gmra.mxu0 %v1696
    %v2125 = vpop.f32.mrf.mxu0
    %v2126 = vadd.f32 %v2112, %v2125
    %v2127 = vpop.f32.mrf.mxu0
    %v2128 = vadd.f32 %v2114, %v2127
    %2129 = vdwg.mxu0
    %2130 = vmatpush.bf16.msra.mxu0 %v2022
    %2131 = vmatpush.bf16.msra.mxu0 %v2020
    %2132 = vmatpush.bf16.msra.mxu0 %v2018
    %2133 = vmatpush.bf16.msra.mxu0 %v2016
    %2134 = vmatpush.bf16.msra.mxu0 %v2014
    %2135 = vmatpush.bf16.msra.mxu0 %v2012
    %2136 = vmatpush.bf16.msra.mxu0 %v2010
    %2137 = vmatpush.bf16.msra.mxu0 %v2008
    %2138 = vmatmul.bf16.gmra.mxu0 %v1697
    %v2139 = vpop.f32.mrf.mxu0
    %v2140 = vadd.f32 %v2126, %v2139
    %v2141 = vpop.f32.mrf.mxu0
    %v2142 = vadd.f32 %v2128, %v2141
    %2143 = vdwg.mxu0
    %2144 = vmatpush.bf16.msra.mxu0 %v1975
    %2145 = vmatpush.bf16.msra.mxu0 %v1973
    %2146 = vmatpush.bf16.msra.mxu0 %v1971
    %2147 = vmatpush.bf16.msra.mxu0 %v1969
    %2148 = vmatpush.bf16.msra.mxu0 %v1967
    %2149 = vmatpush.bf16.msra.mxu0 %v1965
    %2150 = vmatpush.bf16.msra.mxu0 %v1963
    %2151 = vmatpush.bf16.msra.mxu0 %v1961
    %2152 = vmatmul.bf16.gmra.mxu0 %v1694
    %v2153 = vpop.f32.mrf.mxu0
    %v2154 = vadd.f32 %v1765, %v2153
    %v2155 = vpop.f32.mrf.mxu0
    %v2156 = vadd.f32 %v1765, %v2155
    %2157 = vdwg.mxu0
    %2158 = vmatpush.bf16.msra.mxu0 %v1991
    %2159 = vmatpush.bf16.msra.mxu0 %v1989
    %2160 = vmatpush.bf16.msra.mxu0 %v1987
    %2161 = vmatpush.bf16.msra.mxu0 %v1985
    %2162 = vmatpush.bf16.msra.mxu0 %v1983
    %2163 = vmatpush.bf16.msra.mxu0 %v1981
    %2164 = vmatpush.bf16.msra.mxu0 %v1979
    %2165 = vmatpush.bf16.msra.mxu0 %v1977
    %2166 = vmatmul.bf16.gmra.mxu0 %v1695
    %v2167 = vpop.f32.mrf.mxu0
    %v2168 = vadd.f32 %v2154, %v2167
    %v2169 = vpop.f32.mrf.mxu0
    %v2170 = vadd.f32 %v2156, %v2169
    %2171 = vdwg.mxu0
    %2172 = vmatpush.bf16.msra.mxu0 %v2007
    %2173 = vmatpush.bf16.msra.mxu0 %v2005
    %2174 = vmatpush.bf16.msra.mxu0 %v2003
    %2175 = vmatpush.bf16.msra.mxu0 %v2001
    %2176 = vmatpush.bf16.msra.mxu0 %v1999
    %2177 = vmatpush.bf16.msra.mxu0 %v1997
    %2178 = vmatpush.bf16.msra.mxu0 %v1995
    %2179 = vmatpush.bf16.msra.mxu0 %v1993
    %2180 = vmatmul.bf16.gmra.mxu0 %v1696
    %v2181 = vpop.f32.mrf.mxu0
    %v2182 = vadd.f32 %v2168, %v2181
    %v2183 = vpop.f32.mrf.mxu0
    %v2184 = vadd.f32 %v2170, %v2183
    %2185 = vdwg.mxu0
    %2186 = vmatpush.bf16.msra.mxu0 %v2023
    %2187 = vmatpush.bf16.msra.mxu0 %v2021
    %2188 = vmatpush.bf16.msra.mxu0 %v2019
    %2189 = vmatpush.bf16.msra.mxu0 %v2017
    %2190 = vmatpush.bf16.msra.mxu0 %v2015
    %2191 = vmatpush.bf16.msra.mxu0 %v2013
    %2192 = vmatpush.bf16.msra.mxu0 %v2011
    %2193 = vmatpush.bf16.msra.mxu0 %v2009
    %2194 = vmatmul.bf16.gmra.mxu0 %v1697
    %v2195 = vpop.f32.mrf.mxu0
    %v2196 = vadd.f32 %v2182, %v2195
    %v2197 = vpop.f32.mrf.mxu0
    %v2198 = vadd.f32 %v2184, %v2197
    %2199 = vdwg.mxu0
    %v2200 = vmax.f32 %v2140, 0.0
    %v2201 = vmax.f32 %v2196, 0.0
    %v2202 = vmax.f32 %v2142, 0.0
    %v2203 = vmax.f32 %v2198, 0.0
    %v2204 = vpack.c.bf16 %v2202, %v2200
    %v2205 = vpack.c.bf16 %v2203, %v2201
    %v2206 = vld [vmem:[%s5] sm:$0xf]
    %v2207 = vld [vmem:[%s5 + $0x4] sm:$0xf]
    %v2208 = vld [vmem:[%s5 + $0x8] sm:$0xf]
    %v2209 = vld [vmem:[%s5 + $0xc] sm:$0xf]
    %v2210 = vld [vmem:[%s5 + $0x10] sm:$0xf]
    %v2211 = vld [vmem:[%s5 + $0x14] sm:$0xf]
    %v2212 = vld [vmem:[%s5 + $0x18] sm:$0xf]
    %v2213 = vld [vmem:[%s5 + $0x1c] sm:$0xf]
    %v2214 = vld [vmem:[%s5 + $0x20] sm:$0xf]
    %v2215 = vld [vmem:[%s5 + $0x24] sm:$0xf]
    %v2216 = vld [vmem:[%s5 + $0x28] sm:$0xf]
    %v2217 = vld [vmem:[%s5 + $0x2c] sm:$0xf]
    %v2218 = vld [vmem:[%s5 + $0x30] sm:$0xf]
    %v2219 = vld [vmem:[%s5 + $0x34] sm:$0xf]
    %v2220 = vld [vmem:[%s5 + $0x38] sm:$0xf]
    %v2221 = vld [vmem:[%s5 + $0x3c] sm:$0xf]
    %v2222 = vld [vmem:[%s5 + $0x40] sm:$0xf]
    %v2223 = vld [vmem:[%s5 + $0x44] sm:$0xf]
    %v2224 = vld [vmem:[%s5 + $0x48] sm:$0xf]
    %v2225 = vld [vmem:[%s5 + $0x4c] sm:$0xf]
    %v2226 = vld [vmem:[%s5 + $0x50] sm:$0xf]
    %v2227 = vld [vmem:[%s5 + $0x54] sm:$0xf]
    %v2228 = vld [vmem:[%s5 + $0x58] sm:$0xf]
    %v2229 = vld [vmem:[%s5 + $0x5c] sm:$0xf]
    %v2230 = vld [vmem:[%s5 + $0x60] sm:$0xf]
    %v2231 = vld [vmem:[%s5 + $0x64] sm:$0xf]
    %v2232 = vld [vmem:[%s5 + $0x68] sm:$0xf]
    %v2233 = vld [vmem:[%s5 + $0x6c] sm:$0xf]
    %v2234 = vld [vmem:[%s5 + $0x70] sm:$0xf]
    %v2235 = vld [vmem:[%s5 + $0x74] sm:$0xf]
    %v2236 = vld [vmem:[%s5 + $0x78] sm:$0xf]
    %v2237 = vld [vmem:[%s5 + $0x7c] sm:$0xf]
    %v2238 = vld [vmem:[%s6] sm:$0x1]
    %v2240 = vperm.slane %v2238, 0
    %v2274 = vunpack.c.l.b16 %v2206
    %v2275 = vunpack.c.l.b16 %v2207
    %v2276 = vunpack.c.l.b16 %v2208
    %v2277 = vunpack.c.l.b16 %v2209
    %v2278 = vunpack.c.l.b16 %v2210
    %v2279 = vunpack.c.l.b16 %v2211
    %v2280 = vunpack.c.l.b16 %v2212
    %v2281 = vunpack.c.l.b16 %v2213
    %v2282 = vunpack.c.l.b16 %v2214
    %v2283 = vunpack.c.l.b16 %v2215
    %v2284 = vunpack.c.l.b16 %v2216
    %v2285 = vunpack.c.l.b16 %v2217
    %v2286 = vunpack.c.l.b16 %v2218
    %v2287 = vunpack.c.l.b16 %v2219
    %v2288 = vunpack.c.l.b16 %v2220
    %v2289 = vunpack.c.l.b16 %v2221
    %v2290 = vunpack.c.l.b16 %v2222
    %v2291 = vunpack.c.l.b16 %v2223
    %v2292 = vunpack.c.l.b16 %v2224
    %v2293 = vunpack.c.l.b16 %v2225
    %v2294 = vunpack.c.l.b16 %v2226
    %v2295 = vunpack.c.l.b16 %v2227
    %v2296 = vunpack.c.l.b16 %v2228
    %v2297 = vunpack.c.l.b16 %v2229
    %v2298 = vunpack.c.l.b16 %v2230
    %v2299 = vunpack.c.l.b16 %v2231
    %v2300 = vunpack.c.l.b16 %v2232
    %v2301 = vunpack.c.l.b16 %v2233
    %v2302 = vunpack.c.l.b16 %v2234
    %v2303 = vunpack.c.l.b16 %v2235
    %v2304 = vunpack.c.l.b16 %v2236
    %v2305 = vunpack.c.l.b16 %v2237
    %v2306 = vpack.c.b16 %v2275, %v2274
    %v2307 = vpack.c.b16 %v2277, %v2276
    %v2308 = vpack.c.b16 %v2279, %v2278
    %v2309 = vpack.c.b16 %v2281, %v2280
    %v2310 = vpack.c.b16 %v2283, %v2282
    %v2311 = vpack.c.b16 %v2285, %v2284
    %v2312 = vpack.c.b16 %v2287, %v2286
    %v2313 = vpack.c.b16 %v2289, %v2288
    %v2314 = vpack.c.b16 %v2291, %v2290
    %v2315 = vpack.c.b16 %v2293, %v2292
    %v2316 = vpack.c.b16 %v2295, %v2294
    %v2317 = vpack.c.b16 %v2297, %v2296
    %v2318 = vpack.c.b16 %v2299, %v2298
    %v2319 = vpack.c.b16 %v2301, %v2300
    %v2320 = vpack.c.b16 %v2303, %v2302
    %v2321 = vpack.c.b16 %v2305, %v2304
    %2338 = vmatpush.bf16.msra.mxu0 %v2313
    %2339 = vmatpush.bf16.msra.mxu0 %v2312
    %2340 = vmatpush.bf16.msra.mxu0 %v2311
    %2341 = vmatpush.bf16.msra.mxu0 %v2310
    %2342 = vmatpush.bf16.msra.mxu0 %v2309
    %2343 = vmatpush.bf16.msra.mxu0 %v2308
    %2344 = vmatpush.bf16.msra.mxu0 %v2307
    %2345 = vmatpush.bf16.msra.mxu0 %v2306
    %2346 = vmatmul.bf16.gmra.mxu0 %v2204
    %v2347 = vpop.f32.mrf.mxu0
    %v2348 = vadd.f32 %v2240, %v2347
    %v2349 = vpop.f32.mrf.mxu0
    %v2350 = vadd.f32 %v2240, %v2349
    %2351 = vdwg.mxu0
    %2352 = vmatpush.bf16.msra.mxu0 %v2321
    %2353 = vmatpush.bf16.msra.mxu0 %v2320
    %2354 = vmatpush.bf16.msra.mxu0 %v2319
    %2355 = vmatpush.bf16.msra.mxu0 %v2318
    %2356 = vmatpush.bf16.msra.mxu0 %v2317
    %2357 = vmatpush.bf16.msra.mxu0 %v2316
    %2358 = vmatpush.bf16.msra.mxu0 %v2315
    %2359 = vmatpush.bf16.msra.mxu0 %v2314
    %2360 = vmatmul.bf16.gmra.mxu0 %v2205
    %v2361 = vpop.f32.mrf.mxu0
    %v2362 = vadd.f32 %v2348, %v2361
    %v2363 = vpop.f32.mrf.mxu0
    %v2364 = vadd.f32 %v2350, %v2363
    %2365 = vdwg.mxu0
    %v2366 = vmax.f32 %v2362, 0.0
    %v2367 = vmax.f32 %v2364, 0.0
    %v2368 = vpack.c.bf16 %v2367, %v2366
    %v2369 = vld [vmem:[%s7] sm:$0xf]
    %v2370 = vld [vmem:[%s7 + $0x4] sm:$0xf]
    %v2371 = vld [vmem:[%s7 + $0x8] sm:$0xf]
    %v2372 = vld [vmem:[%s7 + $0xc] sm:$0xf]
    %v2373 = vld [vmem:[%s7 + $0x10] sm:$0xf]
    %v2374 = vld [vmem:[%s7 + $0x14] sm:$0xf]
    %v2375 = vld [vmem:[%s7 + $0x18] sm:$0xf]
    %v2376 = vld [vmem:[%s7 + $0x1c] sm:$0xf]
    %v2377 = vld [vmem:[%s7 + $0x20] sm:$0xf]
    %v2378 = vld [vmem:[%s7 + $0x24] sm:$0xf]
    %v2379 = vld [vmem:[%s7 + $0x28] sm:$0xf]
    %v2380 = vld [vmem:[%s7 + $0x2c] sm:$0xf]
    %v2381 = vld [vmem:[%s7 + $0x30] sm:$0xf]
    %v2382 = vld [vmem:[%s7 + $0x34] sm:$0xf]
    %v2383 = vld [vmem:[%s7 + $0x38] sm:$0xf]
    %v2384 = vld [vmem:[%s7 + $0x3c] sm:$0xf]
    %v2385 = vld [vmem:[%s8] sm:$0x1]
    %v2387 = vperm.slane %v2385, 0
    %v2405 = vunpack.c.l.b16 %v2369
    %v2406 = vunpack.c.l.b16 %v2370
    %v2407 = vunpack.c.l.b16 %v2371
    %v2408 = vunpack.c.l.b16 %v2372
    %v2409 = vunpack.c.l.b16 %v2373
    %v2410 = vunpack.c.l.b16 %v2374
    %v2411 = vunpack.c.l.b16 %v2375
    %v2412 = vunpack.c.l.b16 %v2376
    %v2413 = vunpack.c.l.b16 %v2377
    %v2414 = vunpack.c.l.b16 %v2378
    %v2415 = vunpack.c.l.b16 %v2379
    %v2416 = vunpack.c.l.b16 %v2380
    %v2417 = vunpack.c.l.b16 %v2381
    %v2418 = vunpack.c.l.b16 %v2382
    %v2419 = vunpack.c.l.b16 %v2383
    %v2420 = vunpack.c.l.b16 %v2384
    %v2421 = vpack.c.b16 %v2406, %v2405
    %v2422 = vpack.c.b16 %v2408, %v2407
    %v2423 = vpack.c.b16 %v2410, %v2409
    %v2424 = vpack.c.b16 %v2412, %v2411
    %v2425 = vpack.c.b16 %v2414, %v2413
    %v2426 = vpack.c.b16 %v2416, %v2415
    %v2427 = vpack.c.b16 %v2418, %v2417
    %v2428 = vpack.c.b16 %v2420, %v2419
    %2437 = vmatpush.bf16.msra.mxu0 %v2428
    %2438 = vmatpush.bf16.msra.mxu0 %v2427
    %2439 = vmatpush.bf16.msra.mxu0 %v2426
    %2440 = vmatpush.bf16.msra.mxu0 %v2425
    %2441 = vmatpush.bf16.msra.mxu0 %v2424
    %2442 = vmatpush.bf16.msra.mxu0 %v2423
    %2443 = vmatpush.bf16.msra.mxu0 %v2422
    %2444 = vmatpush.bf16.msra.mxu0 %v2421
    %2445 = vmatmul.bf16.gmra.mxu0 %v2368
    %v2446 = vpop.f32.mrf.mxu0
    %v2447 = vadd.f32 %v2387, %v2446
    %v2448 = vpop.f32.mrf.mxu0
    %v2449 = vadd.f32 %v2387, %v2448
    %2450 = vdwg.mxu0
    %v2451 = vmax.f32 %v2447, 0.0
    %v2452 = vmax.f32 %v2449, 0.0
    %v2453 = vpack.c.bf16 %v2452, %v2451
    %v2454 = vld [vmem:[%s9] sm:$0xf]
    %v2455 = vld [vmem:[%s9 + $0x4] sm:$0xf]
    %v2456 = vld [vmem:[%s9 + $0x8] sm:$0xf]
    %v2457 = vld [vmem:[%s9 + $0xc] sm:$0xf]
    %v2458 = vld [vmem:[%s9 + $0x10] sm:$0xf]
    %v2459 = vld [vmem:[%s9 + $0x14] sm:$0xf]
    %v2460 = vld [vmem:[%s9 + $0x18] sm:$0xf]
    %v2461 = vld [vmem:[%s9 + $0x1c] sm:$0xf]
    %v2462 = vld [vmem:[%s10] sm:$0x1]
    %v2464 = vperm.slane %v2462, 0
    %v2474 = vunpack.c.l.b16 %v2454
    %v2475 = vunpack.c.l.b16 %v2455
    %v2476 = vunpack.c.l.b16 %v2456
    %v2477 = vunpack.c.l.b16 %v2457
    %v2478 = vunpack.c.l.b16 %v2458
    %v2479 = vunpack.c.l.b16 %v2459
    %v2480 = vunpack.c.l.b16 %v2460
    %v2481 = vunpack.c.l.b16 %v2461
    %v2482 = vpack.c.b16 %v2475, %v2474
    %v2483 = vpack.c.b16 %v2477, %v2476
    %v2484 = vpack.c.b16 %v2479, %v2478
    %v2485 = vpack.c.b16 %v2481, %v2480
    %vm2490 = vcmask 523264
    %v2492 = vsel %vm2490, %v2453, 0
    %2494 = vmatpush.bf16.msra.mxu0 0
    %2495 = vmatpush.bf16.msra.mxu0 0
    %2496 = vmatpush.bf16.msra.mxu0 0
    %2497 = vmatpush.bf16.msra.mxu0 0
    %2498 = vmatpush.bf16.msra.mxu0 %v2485
    %2499 = vmatpush.bf16.msra.mxu0 %v2484
    %2500 = vmatpush.bf16.msra.mxu0 %v2483
    %2501 = vmatpush.bf16.msra.mxu0 %v2482
    %2502 = vmatmul.bf16.gmra.mxu0 %v2492
    %v2503 = vpop.f32.mrf.mxu0
    %v2504 = vadd.f32 %v2464, %v2503
    %v2505 = vpop.f32.mrf.mxu0
    %v2506 = vadd.f32 %v2464, %v2505
    %2507 = vdwg.mxu0
    %v2508 = vmax.f32 %v2504, 0.0
    %v2509 = vmax.f32 %v2506, 0.0
    %v2510 = vpack.c.bf16 %v2509, %v2508
    %v2511 = vld [vmem:[%s11] sm:$0xf]
    %v2512 = vld [vmem:[%s11 + $0x4] sm:$0xf]
    %v2513 = vld [vmem:[%s11 + $0x8] sm:$0xf]
    %v2514 = vld [vmem:[%s11 + $0xc] sm:$0xf]
    %v2515 = vld [vmem:[%s12] sm:$0x1]
    %v2517 = vperm.slane %v2515, 0
    %v2523 = vunpack.c.l.b16 %v2511
    %v2524 = vunpack.c.l.b16 %v2512
    %v2525 = vunpack.c.l.b16 %v2513
    %v2526 = vunpack.c.l.b16 %v2514
    %v2527 = vpack.c.b16 %v2524, %v2523
    %v2528 = vpack.c.b16 %v2526, %v2525
    %vm2531 = vcmask 261120
    %v2533 = vsel %vm2531, %v2510, 0
    %2535 = vmatpush.bf16.msra.mxu0 0
    %2536 = vmatpush.bf16.msra.mxu0 0
    %2537 = vmatpush.bf16.msra.mxu0 0
    %2538 = vmatpush.bf16.msra.mxu0 0
    %2539 = vmatpush.bf16.msra.mxu0 0
    %2540 = vmatpush.bf16.msra.mxu0 0
    %2541 = vmatpush.bf16.msra.mxu0 %v2528
    %2542 = vmatpush.bf16.msra.mxu0 %v2527
    %2543 = vmatmul.bf16.gmra.mxu0 %v2533
    %v2544 = vpop.f32.mrf.mxu0
    %v2545 = vadd.f32 %v2517, %v2544
    %v2546 = vpop.f32.mrf.mxu0
    %v2547 = vadd.f32 %v2517, %v2546
    %2548 = vdwg.mxu0
    %2549 = vmax.xlane.f32.xlu0 %v2545
    %v2550 = vpop.xlane.xlu0 %2549
    %2551 = vmax.xlane.f32.xlu0 %v2547
    %v2552 = vpop.xlane.xlu0 %2551
    %v2553 = vsub.f32 %v2545, %v2550
    %v2554 = vsub.f32 %v2547, %v2552
    %v2555 = vmul.f32 %v2553, 1.442695
    %v2556 = vpow.pop %v2555
    %v2557 = vmul.f32 %v2554, 1.442695
    %v2558 = vpow.pop %v2557
    %2559 = vadd.xlane.f32.xlu0 %v2556
    %v2560 = vpop.xlane.xlu0 %2559
    %2561 = vadd.xlane.f32.xlu0 %v2558
    %v2562 = vpop.xlane.xlu0 %2561
    %v2563 = vlog2.pop %v2560
    %v2564 = vmul.f32 %v2563, 0.6931472
    %v2565 = vlog2.pop %v2562
    %v2566 = vmul.f32 %v2565, 0.6931472
    %v2567 = vsub.f32 %v2553, %v2564
    %v2568 = vsub.f32 %v2554, %v2566
    %2569 = vst [vmem:[%s13] sm:$0xff] %v2567
    %2570 = vst [vmem:[%s13 + $0x8] sm:$0xff] %v2568
    // Predicated region
    $region58: #{_forward.1} parent=1 // pred_check
      _
    $region59: #{_forward.1} parent=1 // pred_check_branch
      %2572 = sbr.rel (0) target = $region61
    $region60: #{_forward.1} parent=1 // pred_region
      _
    $region61: #{_forward.1} parent=1 // pred_fallthru
      _
    // Predicated region
    $region62: #{_forward.1} parent=1 // pred_check
      _
    $region63: #{_forward.1} parent=1 // pred_check_branch
      %2574 = sbr.rel (0) target = $region65
    $region64: #{_forward.1} parent=1 // pred_region
      _
    $region65: #{_forward.1} parent=1 // pred_fallthru
      _
    %2575 = vsyncpa [#allocation3], 1

</llo_original>
